<compile_context>
chip_gen: v6e
topology: v6e:2x2x1
jax: 0.10.0
libtpu: 0.0.40
codegen_flags: <defaults>
</compile_context>

<pallas_src>
import functools

import jax
import jax.numpy as jnp
from jax import lax
from jax.experimental import pallas as pl
from jax.experimental.pallas import tpu as pltpu


# --------------------------------------------------------------------------
# Generation-aware VMEM budget
# --------------------------------------------------------------------------
def _tpu_vmem_budget():
    """Returns (big_vmem, vmem_limit_bytes)."""
    try:
        cap = int(pltpu.get_tpu_info().vmem_capacity_bytes)
    except Exception:  # be conservative if the query is unavailable
        cap = 64 * 1024 * 1024
    big = cap > 96 * 1024 * 1024           # v5e / v6e: 128 MiB, v7x: 64 MiB
    limit = 100 * 1024 * 1024 if big else 36 * 1024 * 1024
    return big, limit


# --------------------------------------------------------------------------
# Kernel 1: SE(3) transform + pinhole projection
#   (intrinsics pre-folded into a 3x4 matrix, SMEM scalars + VPU FMAs,
#    full (rows, 128) vreg tiles, EUP approx reciprocal, lane-dense stores)
# --------------------------------------------------------------------------
def _transform_project_kernel(pm_ref, pcd_ref, out_ref):
    # pm_ref  : SMEM (B*12,)  row-major 3x4 (K_intr @ Tcl[:3, :]) per batch
    # pcd_ref : VMEM (1, 3, tile_r, 128)  x/y/z planes
    # out_ref : VMEM (1, 3, tile_r, 128)  u/v/z planes (z <= eps => invalid)
    b = pl.program_id(0)
    base = b * 12
    p00 = pm_ref[base + 0]; p01 = pm_ref[base + 1]
    p02 = pm_ref[base + 2]; p03 = pm_ref[base + 3]
    p10 = pm_ref[base + 4]; p11 = pm_ref[base + 5]
    p12 = pm_ref[base + 6]; p13 = pm_ref[base + 7]
    p20 = pm_ref[base + 8]; p21 = pm_ref[base + 9]
    p22 = pm_ref[base + 10]; p23 = pm_ref[base + 11]

    x = pcd_ref[0, 0, :, :]                 # (tile_r, 128)
    y = pcd_ref[0, 1, :, :]
    z = pcd_ref[0, 2, :, :]

    r0 = p00 * x + p01 * y + p02 * z + p03  # fx*cam_x + cx*cam_z
    r1 = p10 * x + p11 * y + p12 * z + p13  # fy*cam_y + cy*cam_z
    zc = p20 * x + p21 * y + p22 * z + p23  # cam_z

    eps = 1e-6
    z_safe = jnp.where(zc > eps, zc, 1.0)
    inv_z = pl.reciprocal(z_safe, approx=True)   # EUP slot, replaces 2 divides

    out_ref[0, 0, :, :] = r0 * inv_z        # u
    out_ref[0, 1, :, :] = r1 * inv_z        # v
    out_ref[0, 2, :, :] = zc                # depth (<= eps means invalid)


def transform_and_project(Tcl, pcd, camera_info):
    """pcd: (B, N, 3), Tcl: (B, 4, 4) -> (B, 3, N) [u, v, z]; z<=eps invalid."""
    B, N, _ = pcd.shape
    fx, fy = camera_info["fx"], camera_info["fy"]
    cx, cy = camera_info["cx"], camera_info["cy"]
    Kmat = jnp.array([[fx, 0.0, cx], [0.0, fy, cy], [0.0, 0.0, 1.0]], jnp.float32)
    P34 = jnp.einsum("ij,bjk->bik", Kmat, Tcl[:, :3, :].astype(jnp.float32))
    pm_flat = P34.reshape(B * 12)                        # SMEM scalars

    pcd_t = jnp.swapaxes(pcd, 1, 2).astype(jnp.float32)  # (B, 3, N)
    NR = -(-N // 128)                                    # point rows of 128 lanes
    tile_r = min(64, NR)                                 # <= 8192 points / step
    n_rt = -(-NR // tile_r)
    NRp = n_rt * tile_r
    Np = NRp * 128
    if Np != N:
        pcd_t = jnp.pad(pcd_t, ((0, 0), (0, 0), (0, Np - N)))
    pcd4 = pcd_t.reshape(B, 3, NRp, 128)

    _, vmem_limit = _tpu_vmem_budget()
    uvz = pl.pallas_call(
        _transform_project_kernel,
        out_shape=jax.ShapeDtypeStruct((B, 3, NRp, 128), jnp.float32),
        grid=(B, n_rt),
        in_specs=[
            pl.BlockSpec(memory_space=pltpu.MemorySpace.SMEM),
            pl.BlockSpec((1, 3, tile_r, 128), lambda b, t: (b, 0, t, 0)),
        ],
        out_specs=pl.BlockSpec((1, 3, tile_r, 128), lambda b, t: (b, 0, t, 0)),
        compiler_params=pltpu.CompilerParams(
            dimension_semantics=("parallel", "parallel"),
            vmem_limit_bytes=vmem_limit),
    )(pm_flat, pcd4)
    # padded tail points carry garbage u/v/z -> sliced away before rasterize
    return uvz.reshape(B, 3, Np)[:, :, :N]


# --------------------------------------------------------------------------
# Kernel 2: conv (K-folded single MXU dot) + bias + LeakyReLU,
#           lane-dense (Cout, tile_p) tiles.
# --------------------------------------------------------------------------
def _conv_lrelu_kernel(x_ref, w_ref, b_ref, o_ref, *, alpha):
    # x_ref : (1, K, tile_p) bf16    w_ref : (Cout, K) bf16
    # b_ref : (Cout, 1)      f32     o_ref : (1, Cout, tile_p)
    y = jnp.dot(w_ref[...], x_ref[0], preferred_element_type=jnp.float32)
    y = y + b_ref[...]                           # bias broadcast along lanes
    y = jnp.where(y > 0, y, alpha * y)           # LeakyReLU (f32 VPU)
    o_ref[0] = y.astype(o_ref.dtype)             # full-width lane-dense store


# --------------------------------------------------------------------------
# Kernel 3: fuse conv + GAP accumulated across pixel tiles + fc1 + pose head,
#           all in one kernel (feature map / pooled feature never hit HBM).
# --------------------------------------------------------------------------
def _conv_gap_head_kernel(x_ref, w_ref, b_ref, w1_ref, b1_ref, w2_ref, b2_ref,
                          o_ref, acc_ref, *, alpha, n_pixels, tile_p):
    pt = pl.program_id(1)

    @pl.when(pt == 0)
    def _():
        acc_ref[...] = jnp.zeros_like(acc_ref)

    y = jnp.dot(w_ref[...], x_ref[0], preferred_element_type=jnp.float32)
    y = y + b_ref[...]
    y = jnp.where(y > 0, y, alpha * y)
    # mask pixel columns that are only layout padding before pooling
    col = lax.broadcasted_iota(jnp.int32, y.shape, 1) + pt * tile_p
    y = jnp.where(col < n_pixels, y, 0.0)
    acc_ref[...] += jnp.sum(y, axis=1, keepdims=True)      # (Cout, 1)

    @pl.when(pt == pl.num_programs(1) - 1)
    def _():
        g = acc_ref[...] * (1.0 / n_pixels)                 # GAP, (Cout, 1)
        # broadcast to 128 lanes so both head matmuls use normal-width RHS
        gb = jnp.broadcast_to(g, (g.shape[0], 128))
        h = jnp.dot(w1_ref[...], gb, preferred_element_type=jnp.float32)
        h = h + b1_ref[...]
        h = jnp.where(h > 0, h, alpha * h)
        o = jnp.dot(w2_ref[...], h, preferred_element_type=jnp.float32)
        o = o + b2_ref[...]
        o_ref[0] = o[:, 0:1].astype(o_ref.dtype)            # (n_out, 1)


def conv2d_lrelu(x_nchw, w_hwio, b, stride, alpha=0.01,
                 out_dtype=jnp.bfloat16, gap_head=None):
    """SAME conv + bias + LeakyReLU in channels-first, lane-dense-spatial layout.

    x: (B, Cin, H, W), w: (kh, kw, Cin, Cout), b: (Cout,).
    Returns (B, Cout, Ho, Wo); with gap_head=(fc1_w, fc1_b, head_w, head_b)
    returns the fused GAP + MLP-head output (B, n_out) instead.
    """
    B, Cin, H, W = x_nchw.shape
    kh, kw, Cin_w, Cout = w_hwio.shape
    assert Cin_w == Cin
    s = stride
    ph, pw = kh // 2, kw // 2
    Ho = (H + 2 * ph - kh) // s + 1
    Wo = (W + 2 * pw - kw) // s + 1
    P = Ho * Wo
    K = kh * kw * Cin

    # ---- wrapper-side im2col: (B, K, P), pixels on lanes, taps+channels on K.
    xp = jnp.pad(x_nchw, ((0, 0), (0, 0), (ph, ph), (pw, pw))).astype(jnp.bfloat16)
    cols = []
    for dy in range(kh):
        for dx in range(kw):
            win = xp[:, :, dy:dy + (Ho - 1) * s + 1:s, dx:dx + (Wo - 1) * s + 1:s]
            cols.append(win.reshape(B, Cin, P))
    xq = jnp.concatenate(cols, axis=1)                       # (B, K, P) bf16

    big_vmem, vmem_limit = _tpu_vmem_budget()
    if P > 1024:
        tile_p = 1024 if big_vmem else 512
    else:
        tile_p = ((P + 127) // 128) * 128
    n_pt = pl.cdiv(P, tile_p)
    Pp = n_pt * tile_p
    if Pp != P:
        xq = jnp.pad(xq, ((0, 0), (0, 0), (0, Pp - P)))

    wq = jnp.transpose(w_hwio.reshape(K, Cout)).astype(jnp.bfloat16)   # (Cout, K)
    bq = b.reshape(Cout, 1).astype(jnp.float32)

    x_spec = pl.BlockSpec((1, K, tile_p), lambda bi, pt: (bi, 0, pt))
    if big_vmem and n_pt >= 3:
        try:  # deeper input buffering where VMEM allows (v5e/v6e)
            x_spec = pl.BlockSpec((1, K, tile_p), lambda bi, pt: (bi, 0, pt),
                                  pipeline_mode=pl.Buffered(3))
        except Exception:
            pass
    w_spec = pl.BlockSpec((Cout, K), lambda bi, pt: (0, 0))
    b_spec = pl.BlockSpec((Cout, 1), lambda bi, pt: (0, 0))

    if gap_head is None:
        y = pl.pallas_call(
            functools.partial(_conv_lrelu_kernel, alpha=alpha),
            out_shape=jax.ShapeDtypeStruct((B, Cout, Pp), out_dtype),
            grid=(B, n_pt),
            in_specs=[x_spec, w_spec, b_spec],
            out_specs=pl.BlockSpec((1, Cout, tile_p), lambda bi, pt: (bi, 0, pt)),
            compiler_params=pltpu.CompilerParams(
                dimension_semantics=("parallel", "parallel"),
                vmem_limit_bytes=vmem_limit),
        )(xq, wq, bq)
        return y[:, :, :P].reshape(B, Cout, Ho, Wo)

    fc1_w, fc1_b, head_w, head_b = gap_head
    Fh = fc1_w.shape[1]
    n_out = head_w.shape[1]
    w1t = jnp.transpose(fc1_w).astype(jnp.float32)           # (Fh, Cout)
    b1q = fc1_b.reshape(Fh, 1).astype(jnp.float32)
    w2t = jnp.transpose(head_w).astype(jnp.float32)          # (n_out, Fh)
    b2q = head_b.reshape(n_out, 1).astype(jnp.float32)

    pose = pl.pallas_call(
        functools.partial(_conv_gap_head_kernel, alpha=alpha,
                          n_pixels=P, tile_p=tile_p),
        out_shape=jax.ShapeDtypeStruct((B, n_out, 1), jnp.float32),
        grid=(B, n_pt),
        in_specs=[x_spec, w_spec, b_spec,
                  pl.BlockSpec((Fh, Cout), lambda bi, pt: (0, 0)),
                  pl.BlockSpec((Fh, 1), lambda bi, pt: (0, 0)),
                  pl.BlockSpec((n_out, Fh), lambda bi, pt: (0, 0)),
                  pl.BlockSpec((n_out, 1), lambda bi, pt: (0, 0))],
        out_specs=pl.BlockSpec((1, n_out, 1), lambda bi, pt: (bi, 0, 0)),
        scratch_shapes=[pltpu.VMEM((Cout, 1), jnp.float32)],
        compiler_params=pltpu.CompilerParams(
            dimension_semantics=("parallel", "arbitrary"),
            vmem_limit_bytes=vmem_limit),
    )(xq, wq, bq, w1t, b1q, w2t, b2q)
    return pose.reshape(B, n_out)


# --------------------------------------------------------------------------
# DepthImgGenerator.project : rasterize projected points into a depth image
# --------------------------------------------------------------------------
def rasterize_depth(uvz, H, W, max_depth):
    # TODO(synk): the data-dependent z-buffer scatter-min has no clean Pallas
    # TPU equivalent without pre-sorted/bucketed points; it stays in XLA.
    B, _, N = uvz.shape
    u = jnp.round(uvz[:, 0]).astype(jnp.int32)
    v = jnp.round(uvz[:, 1]).astype(jnp.int32)
    z = uvz[:, 2]
    valid = (z > 1e-6) & (u >= 0) & (u < W) & (v >= 0) & (v < H)
    b_idx = jnp.broadcast_to(jnp.arange(B)[:, None], (B, N))
    lin = b_idx * (H * W) + jnp.clip(v, 0, H - 1) * W + jnp.clip(u, 0, W - 1)
    lin = jnp.where(valid, lin, B * H * W)                # dump bucket
    zval = jnp.where(valid, z, jnp.inf)
    flat = jnp.full((B * H * W + 1,), jnp.inf, jnp.float32)
    flat = flat.at[lin.reshape(-1)].min(zval.reshape(-1))
    depth = flat[:B * H * W].reshape(B, H, W)
    depth = jnp.where(jnp.isinf(depth), 0.0, depth) / max_depth
    return depth[:, None, :, :]                           # NCHW (B, 1, H, W)


# --------------------------------------------------------------------------
# Parameters (synthetic, deterministic)
# --------------------------------------------------------------------------
C1, C2, C3, FHID = 8, 16, 32, 32


def init_params(key):
    def conv_p(k, kh, kw, cin, cout):
        w = jax.random.normal(k, (kh, kw, cin, cout), jnp.float32)
        w = w * (1.0 / jnp.sqrt(kh * kw * cin))
        return w, jnp.zeros((cout,), jnp.float32)

    def fc_p(k, cin, cout):
        w = jax.random.normal(k, (cin, cout), jnp.float32) * (1.0 / jnp.sqrt(cin))
        return w, jnp.zeros((cout,), jnp.float32)

    ks = jax.random.split(key, 8)
    rgb1_w, rgb1_b = conv_p(ks[0], 3, 3, 3, C1)
    rgb2_w, rgb2_b = conv_p(ks[1], 3, 3, C1, C2)
    dep1_w, dep1_b = conv_p(ks[2], 3, 3, 1, C1)
    dep2_w, dep2_b = conv_p(ks[3], 3, 3, C1, C2)
    fuse_w, fuse_b = conv_p(ks[4], 3, 3, 2 * C2, C3)
    fc1_w, fc1_b = fc_p(ks[5], C3, FHID)
    rot_w, rot_b = fc_p(ks[6], FHID, 4)
    tr_w, tr_b = fc_p(ks[7], FHID, 3)

    # rgb + depth branch convs fused into a single block-diagonal conv.
    enc1_w = jnp.zeros((3, 3, 4, 2 * C1), jnp.float32)
    enc1_w = enc1_w.at[:, :, :3, :C1].set(rgb1_w)
    enc1_w = enc1_w.at[:, :, 3:, C1:].set(dep1_w)
    enc1_b = jnp.concatenate([rgb1_b, dep1_b])

    enc2_w = jnp.zeros((3, 3, 2 * C1, 2 * C2), jnp.float32)
    enc2_w = enc2_w.at[:, :, :C1, :C2].set(rgb2_w)
    enc2_w = enc2_w.at[:, :, C1:, C2:].set(dep2_w)
    enc2_b = jnp.concatenate([rgb2_b, dep2_b])

    # fc_rot (quat, 4) + fc_tr (trans, 3) fused into one head matmul.
    head_w = jnp.concatenate([rot_w, tr_w], axis=1)    # (FHID, 7)
    head_b = jnp.concatenate([rot_b, tr_b])            # (7,)

    return {
        "enc1": (enc1_w, enc1_b),
        "enc2": (enc2_w, enc2_b),
        "fuse": (fuse_w, fuse_b),
        "fc1": (fc1_w, fc1_b),
        "head": (head_w, head_b),
    }


# --------------------------------------------------------------------------
# Encoder (fused rgb/depth branches -> fuse conv + GAP + pose heads in-kernel)
# --------------------------------------------------------------------------
def encoder_forward(params, img_nchw, depth_nchw):
    x = jnp.concatenate([img_nchw, depth_nchw], axis=1)   # (B, 4, H, W)

    # NOTE: bf16 intermediates are a perf choice (MXU operands / half the HBM
    # traffic); switch out_dtype to jnp.float32 for bit-closer reference match.
    y = conv2d_lrelu(x, *params["enc1"], stride=2, out_dtype=jnp.bfloat16)
    y = conv2d_lrelu(y, *params["enc2"], stride=2, out_dtype=jnp.bfloat16)
    pose = conv2d_lrelu(
        y, *params["fuse"], stride=1,
        gap_head=(params["fc1"][0], params["fc1"][1],
                  params["head"][0], params["head"][1]))    # (B, 7)

    q = pose[:, :4]
    t = pose[:, 4:]
    q = q / (jnp.linalg.norm(q, axis=-1, keepdims=True) + 1e-8)
    return jnp.concatenate([q, t], axis=-1)                # (B, 7) pose x0


# --------------------------------------------------------------------------
# ProjFusionNet.forward
# --------------------------------------------------------------------------
def projfusion_forward(params, img, pcd, Tcl, camera_info):
    uvz = transform_and_project(Tcl, pcd, camera_info)                  # (B, 3, N)
    depth_img = rasterize_depth(uvz, camera_info["H"], camera_info["W"],
                                camera_info["max_depth"])               # (B, 1, H, W)
    return encoder_forward(params, img, depth_img)


# --------------------------------------------------------------------------
if __name__ == "__main__":
    key = jax.random.PRNGKey(0)
    kimg, kpcd = jax.random.split(key, 2)

    B, H, W, N = 2, 16, 16, 256
    img = jax.random.normal(kimg, (B, 3, H, W), jnp.float32)            # NCHW
    pcd = jax.random.normal(kpcd, (B, N, 3), jnp.float32) * 2.0
    pcd = pcd + jnp.array([0.0, 0.0, 5.0], jnp.float32)                 # in front of camera

    Tcl = jnp.tile(jnp.eye(4, dtype=jnp.float32)[None], (B, 1, 1))
    Tcl = Tcl.at[:, :3, 3].set(
        jnp.array([[0.1, -0.05, 0.2], [0.0, 0.1, -0.1]], jnp.float32))

    camera_info = {"fx": 8.0, "fy": 8.0, "cx": W / 2.0, "cy": H / 2.0,
                   "H": H, "W": W, "max_depth": 10.0}

    params = init_params(jax.random.PRNGKey(1))

    fwd = jax.jit(lambda a, b, c: projfusion_forward(params, a, b, c, camera_info))
    out = jax.block_until_ready(fwd(img, pcd, Tcl))
    assert out.shape == (B, 7)
    assert bool(jnp.all(jnp.isfinite(out)))
    print("KERNEL_OK")
</pallas_src>

<mosaic_0001>
module attributes {stable_mosaic.version = 11 : i64} {
  func.func private @main(%arg0: i32) attributes {dimension_semantics = [#tpu.dimension_semantics<core_parallel>], iteration_bounds = array<i64: 2>, tpu.core_type = #tpu.core_type<sc_scalar_subcore>, window_params = []} {
    return
  }
}

module attributes {stable_mosaic.version = 11 : i64} {
  func.func private @main(%arg0: i32) attributes {dimension_semantics = [#tpu.dimension_semantics<core_parallel>], iteration_bounds = array<i64: 2>, tpu.core_type = #tpu.core_type<sc_scalar_subcore>, window_params = []} {
    return
  }
}

module attributes {stable_mosaic.version = 11 : i64} {
  func.func @_transform_project_kernel(%arg0: i32, %arg1: i32, %arg2: memref<24xf32, #tpu.memory_space<smem>>, %arg3: memref<1x3x2x128xf32, #tpu.memory_space<vmem>>, %arg4: memref<1x3x2x128xf32, #tpu.memory_space<vmem>>) attributes {dimension_semantics = [#tpu.dimension_semantics<parallel>, #tpu.dimension_semantics<parallel>], iteration_bounds = array<i64: 2, 1>, scalar_prefetch = 0 : i64, scratch_operands = 0 : i64, tpu.core_type = #tpu.core_type<tc>, window_params = [{transform_indices = @transform_0, window_bounds = array<i64: 24>}, {transform_indices = @transform_1, window_bounds = array<i64: 1, 3, 2, 128>}, {transform_indices = @transform_2, window_bounds = array<i64: 1, 3, 2, 128>}]} {
    %c12_i32 = arith.constant 12 : i32
    %0 = arith.muli %arg0, %c12_i32 : i32
    %c0_i32 = arith.constant 0 : i32
    %1 = arith.addi %0, %c0_i32 : i32
    %2 = arith.index_cast %1 : i32 to index
    %3 = memref.load %arg2[%2] : memref<24xf32, #tpu.memory_space<smem>>
    %c1_i32 = arith.constant 1 : i32
    %4 = arith.addi %0, %c1_i32 : i32
    %5 = arith.index_cast %4 : i32 to index
    %6 = memref.load %arg2[%5] : memref<24xf32, #tpu.memory_space<smem>>
    %c2_i32 = arith.constant 2 : i32
    %7 = arith.addi %0, %c2_i32 : i32
    %8 = arith.index_cast %7 : i32 to index
    %9 = memref.load %arg2[%8] : memref<24xf32, #tpu.memory_space<smem>>
    %c3_i32 = arith.constant 3 : i32
    %10 = arith.addi %0, %c3_i32 : i32
    %11 = arith.index_cast %10 : i32 to index
    %12 = memref.load %arg2[%11] : memref<24xf32, #tpu.memory_space<smem>>
    %c4_i32 = arith.constant 4 : i32
    %13 = arith.addi %0, %c4_i32 : i32
    %14 = arith.index_cast %13 : i32 to index
    %15 = memref.load %arg2[%14] : memref<24xf32, #tpu.memory_space<smem>>
    %c5_i32 = arith.constant 5 : i32
    %16 = arith.addi %0, %c5_i32 : i32
    %17 = arith.index_cast %16 : i32 to index
    %18 = memref.load %arg2[%17] : memref<24xf32, #tpu.memory_space<smem>>
    %c6_i32 = arith.constant 6 : i32
    %19 = arith.addi %0, %c6_i32 : i32
    %20 = arith.index_cast %19 : i32 to index
    %21 = memref.load %arg2[%20] : memref<24xf32, #tpu.memory_space<smem>>
    %c7_i32 = arith.constant 7 : i32
    %22 = arith.addi %0, %c7_i32 : i32
    %23 = arith.index_cast %22 : i32 to index
    %24 = memref.load %arg2[%23] : memref<24xf32, #tpu.memory_space<smem>>
    %c8_i32 = arith.constant 8 : i32
    %25 = arith.addi %0, %c8_i32 : i32
    %26 = arith.index_cast %25 : i32 to index
    %27 = memref.load %arg2[%26] : memref<24xf32, #tpu.memory_space<smem>>
    %c9_i32 = arith.constant 9 : i32
    %28 = arith.addi %0, %c9_i32 : i32
    %29 = arith.index_cast %28 : i32 to index
    %30 = memref.load %arg2[%29] : memref<24xf32, #tpu.memory_space<smem>>
    %c10_i32 = arith.constant 10 : i32
    %31 = arith.addi %0, %c10_i32 : i32
    %32 = arith.index_cast %31 : i32 to index
    %33 = memref.load %arg2[%32] : memref<24xf32, #tpu.memory_space<smem>>
    %c11_i32 = arith.constant 11 : i32
    %34 = arith.addi %0, %c11_i32 : i32
    %35 = arith.index_cast %34 : i32 to index
    %36 = memref.load %arg2[%35] : memref<24xf32, #tpu.memory_space<smem>>
    %c0 = arith.constant 0 : index
    %c0_0 = arith.constant 0 : index
    %c0_1 = arith.constant 0 : index
    %c0_2 = arith.constant 0 : index
    %37 = vector.load %arg3[%c0, %c0_0, %c0_1, %c0_2] : memref<1x3x2x128xf32, #tpu.memory_space<vmem>>, vector<1x1x2x128xf32>
    %38 = vector.shape_cast %37 : vector<1x1x2x128xf32> to vector<2x128xf32>
    %c0_3 = arith.constant 0 : index
    %c1 = arith.constant 1 : index
    %c0_4 = arith.constant 0 : index
    %c0_5 = arith.constant 0 : index
    %39 = vector.load %arg3[%c0_3, %c1, %c0_4, %c0_5] : memref<1x3x2x128xf32, #tpu.memory_space<vmem>>, vector<1x1x2x128xf32>
    %40 = vector.shape_cast %39 : vector<1x1x2x128xf32> to vector<2x128xf32>
    %c0_6 = arith.constant 0 : index
    %c2 = arith.constant 2 : index
    %c0_7 = arith.constant 0 : index
    %c0_8 = arith.constant 0 : index
    %41 = vector.load %arg3[%c0_6, %c2, %c0_7, %c0_8] : memref<1x3x2x128xf32, #tpu.memory_space<vmem>>, vector<1x1x2x128xf32>
    %42 = vector.shape_cast %41 : vector<1x1x2x128xf32> to vector<2x128xf32>
    %43 = vector.broadcast %3 : f32 to vector<2x128xf32>
    %44 = arith.mulf %43, %38 : vector<2x128xf32>
    %45 = vector.broadcast %6 : f32 to vector<2x128xf32>
    %46 = arith.mulf %45, %40 : vector<2x128xf32>
    %47 = arith.addf %44, %46 : vector<2x128xf32>
    %48 = vector.broadcast %9 : f32 to vector<2x128xf32>
    %49 = arith.mulf %48, %42 : vector<2x128xf32>
    %50 = arith.addf %47, %49 : vector<2x128xf32>
    %51 = vector.broadcast %12 : f32 to vector<2x128xf32>
    %52 = arith.addf %50, %51 : vector<2x128xf32>
    %53 = vector.broadcast %15 : f32 to vector<2x128xf32>
    %54 = arith.mulf %53, %38 : vector<2x128xf32>
    %55 = vector.broadcast %18 : f32 to vector<2x128xf32>
    %56 = arith.mulf %55, %40 : vector<2x128xf32>
    %57 = arith.addf %54, %56 : vector<2x128xf32>
    %58 = vector.broadcast %21 : f32 to vector<2x128xf32>
    %59 = arith.mulf %58, %42 : vector<2x128xf32>
    %60 = arith.addf %57, %59 : vector<2x128xf32>
    %61 = vector.broadcast %24 : f32 to vector<2x128xf32>
    %62 = arith.addf %60, %61 : vector<2x128xf32>
    %63 = vector.broadcast %27 : f32 to vector<2x128xf32>
    %64 = arith.mulf %63, %38 : vector<2x128xf32>
    %65 = vector.broadcast %30 : f32 to vector<2x128xf32>
    %66 = arith.mulf %65, %40 : vector<2x128xf32>
    %67 = arith.addf %64, %66 : vector<2x128xf32>
    %68 = vector.broadcast %33 : f32 to vector<2x128xf32>
    %69 = arith.mulf %68, %42 : vector<2x128xf32>
    %70 = arith.addf %67, %69 : vector<2x128xf32>
    %71 = vector.broadcast %36 : f32 to vector<2x128xf32>
    %72 = arith.addf %70, %71 : vector<2x128xf32>
    %cst = arith.constant 9.99999997E-7 : f32
    %73 = vector.broadcast %cst : f32 to vector<2x128xf32>
    %74 = arith.cmpf ogt, %72, %73 : vector<2x128xf32>
    %cst_9 = arith.constant 1.000000e+00 : f32
    %75 = vector.broadcast %cst_9 : f32 to vector<2x128xf32>
    %76 = arith.select %74, %72, %75 : vector<2x128xi1>, vector<2x128xf32>
    %77 = tpu.reciprocal %76 {approx = true} : vector<2x128xf32> -> vector<2x128xf32>
    %78 = arith.mulf %52, %77 : vector<2x128xf32>
    %c0_10 = arith.constant 0 : index
    %c0_11 = arith.constant 0 : index
    %c0_12 = arith.constant 0 : index
    %c0_13 = arith.constant 0 : index
    %79 = vector.load %arg4[%c0_10, %c0_11, %c0_12, %c0_13] : memref<1x3x2x128xf32, #tpu.memory_space<vmem>>, vector<1x1x2x128xf32>
    %80 = vector.shape_cast %79 : vector<1x1x2x128xf32> to vector<2x128xf32>
    %81 = vector.shape_cast %78 : vector<2x128xf32> to vector<1x1x2x128xf32>
    tpu.vector_store %arg4[%c0_10, %c0_11, %c0_12, %c0_13], %81 {strides = array<i32>} : memref<1x3x2x128xf32, #tpu.memory_space<vmem>>, vector<1x1x2x128xf32>,
    %82 = arith.mulf %62, %77 : vector<2x128xf32>
    %c0_14 = arith.constant 0 : index
    %c1_15 = arith.constant 1 : index
    %c0_16 = arith.constant 0 : index
    %c0_17 = arith.constant 0 : index
    %83 = vector.load %arg4[%c0_14, %c1_15, %c0_16, %c0_17] : memref<1x3x2x128xf32, #tpu.memory_space<vmem>>, vector<1x1x2x128xf32>
    %84 = vector.shape_cast %83 : vector<1x1x2x128xf32> to vector<2x128xf32>
    %85 = vector.shape_cast %82 : vector<2x128xf32> to vector<1x1x2x128xf32>
    tpu.vector_store %arg4[%c0_14, %c1_15, %c0_16, %c0_17], %85 {strides = array<i32>} : memref<1x3x2x128xf32, #tpu.memory_space<vmem>>, vector<1x1x2x128xf32>,
    %c0_18 = arith.constant 0 : index
    %c2_19 = arith.constant 2 : index
    %c0_20 = arith.constant 0 : index
    %c0_21 = arith.constant 0 : index
    %86 = vector.load %arg4[%c0_18, %c2_19, %c0_20, %c0_21] : memref<1x3x2x128xf32, #tpu.memory_space<vmem>>, vector<1x1x2x128xf32>
    %87 = vector.shape_cast %86 : vector<1x1x2x128xf32> to vector<2x128xf32>
    %88 = vector.shape_cast %72 : vector<2x128xf32> to vector<1x1x2x128xf32>
    tpu.vector_store %arg4[%c0_18, %c2_19, %c0_20, %c0_21], %88 {strides = array<i32>} : memref<1x3x2x128xf32, #tpu.memory_space<vmem>>, vector<1x1x2x128xf32>,
    return
  }
  func.func @transform_0(%arg0: i32, %arg1: i32) -> i32 {
    %c0_i32 = arith.constant 0 : i32
    %c0_i32_0 = arith.constant 0 : i32
    return %c0_i32 : i32
  }
  func.func @transform_1(%arg0: i32, %arg1: i32) -> (i32, i32, i32, i32) {
    %c0_i32 = arith.constant 0 : i32
    %c0_i32_0 = arith.constant 0 : i32
    %c0_i32_1 = arith.constant 0 : i32
    return %arg0, %c0_i32, %arg1, %c0_i32_0 : i32, i32, i32, i32
  }
  func.func @transform_2(%arg0: i32, %arg1: i32) -> (i32, i32, i32, i32) {
    %c0_i32 = arith.constant 0 : i32
    %c0_i32_0 = arith.constant 0 : i32
    %c0_i32_1 = arith.constant 0 : i32
    return %arg0, %c0_i32, %arg1, %c0_i32_0 : i32, i32, i32, i32
  }
}

module attributes {stable_mosaic.version = 11 : i64} {
  func.func @_conv_lrelu_kernel(%arg0: i32, %arg1: i32, %arg2: memref<1x36x128xbf16, #tpu.memory_space<vmem>>, %arg3: memref<16x36xbf16, #tpu.memory_space<vmem>>, %arg4: memref<16x1xf32, #tpu.memory_space<vmem>>, %arg5: memref<1x16x128xbf16, #tpu.memory_space<vmem>>) attributes {dimension_semantics = [#tpu.dimension_semantics<parallel>, #tpu.dimension_semantics<parallel>], iteration_bounds = array<i64: 2, 1>, scalar_prefetch = 0 : i64, scratch_operands = 0 : i64, tpu.core_type = #tpu.core_type<tc>, window_params = [{transform_indices = @transform_0, window_bounds = array<i64: 1, 36, 128>}, {pipeline_mode = #tpu.pipeline_mode<synchronous>, transform_indices = @transform_1, window_bounds = array<i64: 16, 36>}, {pipeline_mode = #tpu.pipeline_mode<synchronous>, transform_indices = @transform_2, window_bounds = array<i64: 16, 1>}, {transform_indices = @transform_3, window_bounds = array<i64: 1, 16, 128>}]} {
    %c0 = arith.constant 0 : index
    %c0_0 = arith.constant 0 : index
    %0 = vector.load %arg3[%c0, %c0_0] : memref<16x36xbf16, #tpu.memory_space<vmem>>, vector<16x36xbf16>
    %c0_1 = arith.constant 0 : index
    %c0_2 = arith.constant 0 : index
    %c0_3 = arith.constant 0 : index
    %1 = vector.load %arg2[%c0_1, %c0_2, %c0_3] : memref<1x36x128xbf16, #tpu.memory_space<vmem>>, vector<1x36x128xbf16>
    %2 = vector.shape_cast %1 : vector<1x36x128xbf16> to vector<36x128xbf16>
    %cst = arith.constant dense<0.000000e+00> : vector<16x128xf32>
    %3 = tpu.matmul %0, %2, %cst {dimension_numbers = #tpu.dot_dimension_numbers<[1], [0], [0], [1], [0, 0, 1, 1], [], []>} : vector<16x36xbf16>, vector<36x128xbf16>, vector<16x128xf32> -> vector<16x128xf32>
    %c0_4 = arith.constant 0 : index
    %c0_5 = arith.constant 0 : index
    %4 = vector.load %arg4[%c0_4, %c0_5] : memref<16x1xf32, #tpu.memory_space<vmem>>, vector<16x1xf32>
    %5 = vector.broadcast %4 : vector<16x1xf32> to vector<16x128xf32>
    %6 = arith.addf %3, %5 : vector<16x128xf32>
    %cst_6 = arith.constant 0.000000e+00 : f32
    %7 = vector.broadcast %cst_6 : f32 to vector<16x128xf32>
    %8 = arith.cmpf ogt, %6, %7 : vector<16x128xf32>
    %cst_7 = arith.constant 0.00999999977 : f32
    %9 = vector.broadcast %cst_7 : f32 to vector<16x128xf32>
    %10 = arith.mulf %9, %6 : vector<16x128xf32>
    %11 = arith.select %8, %6, %10 : vector<16x128xi1>, vector<16x128xf32>
    %12 = arith.truncf %11 : vector<16x128xf32> to vector<16x128xbf16>
    %c0_8 = arith.constant 0 : index
    %c0_9 = arith.constant 0 : index
    %c0_10 = arith.constant 0 : index
    %13 = vector.load %arg5[%c0_8, %c0_9, %c0_10] : memref<1x16x128xbf16, #tpu.memory_space<vmem>>, vector<1x16x128xbf16>
    %14 = vector.shape_cast %13 : vector<1x16x128xbf16> to vector<16x128xbf16>
    %15 = vector.shape_cast %12 : vector<16x128xbf16> to vector<1x16x128xbf16>
    tpu.vector_store %arg5[%c0_8, %c0_9, %c0_10], %15 {strides = array<i32>} : memref<1x16x128xbf16, #tpu.memory_space<vmem>>, vector<1x16x128xbf16>,
    return
  }
  func.func @transform_0(%arg0: i32, %arg1: i32) -> (i32, i32, i32) {
    %c0_i32 = arith.constant 0 : i32
    %c0_i32_0 = arith.constant 0 : i32
    return %arg0, %c0_i32, %arg1 : i32, i32, i32
  }
  func.func @transform_1(%arg0: i32, %arg1: i32) -> (i32, i32) {
    %c0_i32 = arith.constant 0 : i32
    %c0_i32_0 = arith.constant 0 : i32
    %c0_i32_1 = arith.constant 0 : i32
    return %c0_i32, %c0_i32_0 : i32, i32
  }
  func.func @transform_2(%arg0: i32, %arg1: i32) -> (i32, i32) {
    %c0_i32 = arith.constant 0 : i32
    %c0_i32_0 = arith.constant 0 : i32
    %c0_i32_1 = arith.constant 0 : i32
    return %c0_i32, %c0_i32_0 : i32, i32
  }
  func.func @transform_3(%arg0: i32, %arg1: i32) -> (i32, i32, i32) {
    %c0_i32 = arith.constant 0 : i32
    %c0_i32_0 = arith.constant 0 : i32
    return %arg0, %c0_i32, %arg1 : i32, i32, i32
  }
}

module attributes {stable_mosaic.version = 11 : i64} {
  func.func @_conv_lrelu_kernel(%arg0: i32, %arg1: i32, %arg2: memref<1x144x128xbf16, #tpu.memory_space<vmem>>, %arg3: memref<32x144xbf16, #tpu.memory_space<vmem>>, %arg4: memref<32x1xf32, #tpu.memory_space<vmem>>, %arg5: memref<1x32x128xbf16, #tpu.memory_space<vmem>>) attributes {dimension_semantics = [#tpu.dimension_semantics<parallel>, #tpu.dimension_semantics<parallel>], iteration_bounds = array<i64: 2, 1>, scalar_prefetch = 0 : i64, scratch_operands = 0 : i64, tpu.core_type = #tpu.core_type<tc>, window_params = [{transform_indices = @transform_0, window_bounds = array<i64: 1, 144, 128>}, {pipeline_mode = #tpu.pipeline_mode<synchronous>, transform_indices = @transform_1, window_bounds = array<i64: 32, 144>}, {pipeline_mode = #tpu.pipeline_mode<synchronous>, transform_indices = @transform_2, window_bounds = array<i64: 32, 1>}, {transform_indices = @transform_3, window_bounds = array<i64: 1, 32, 128>}]} {
    %c0 = arith.constant 0 : index
    %c0_0 = arith.constant 0 : index
    %0 = vector.load %arg3[%c0, %c0_0] : memref<32x144xbf16, #tpu.memory_space<vmem>>, vector<32x144xbf16>
    %c0_1 = arith.constant 0 : index
    %c0_2 = arith.constant 0 : index
    %c0_3 = arith.constant 0 : index
    %1 = vector.load %arg2[%c0_1, %c0_2, %c0_3] : memref<1x144x128xbf16, #tpu.memory_space<vmem>>, vector<1x144x128xbf16>
    %2 = vector.shape_cast %1 : vector<1x144x128xbf16> to vector<144x128xbf16>
    %cst = arith.constant dense<0.000000e+00> : vector<32x128xf32>
    %3 = tpu.matmul %0, %2, %cst {dimension_numbers = #tpu.dot_dimension_numbers<[1], [0], [0], [1], [0, 0, 1, 1], [], []>} : vector<32x144xbf16>, vector<144x128xbf16>, vector<32x128xf32> -> vector<32x128xf32>
    %c0_4 = arith.constant 0 : index
    %c0_5 = arith.constant 0 : index
    %4 = vector.load %arg4[%c0_4, %c0_5] : memref<32x1xf32, #tpu.memory_space<vmem>>, vector<32x1xf32>
    %5 = vector.broadcast %4 : vector<32x1xf32> to vector<32x128xf32>
    %6 = arith.addf %3, %5 : vector<32x128xf32>
    %cst_6 = arith.constant 0.000000e+00 : f32
    %7 = vector.broadcast %cst_6 : f32 to vector<32x128xf32>
    %8 = arith.cmpf ogt, %6, %7 : vector<32x128xf32>
    %cst_7 = arith.constant 0.00999999977 : f32
    %9 = vector.broadcast %cst_7 : f32 to vector<32x128xf32>
    %10 = arith.mulf %9, %6 : vector<32x128xf32>
    %11 = arith.select %8, %6, %10 : vector<32x128xi1>, vector<32x128xf32>
    %12 = arith.truncf %11 : vector<32x128xf32> to vector<32x128xbf16>
    %c0_8 = arith.constant 0 : index
    %c0_9 = arith.constant 0 : index
    %c0_10 = arith.constant 0 : index
    %13 = vector.load %arg5[%c0_8, %c0_9, %c0_10] : memref<1x32x128xbf16, #tpu.memory_space<vmem>>, vector<1x32x128xbf16>
    %14 = vector.shape_cast %13 : vector<1x32x128xbf16> to vector<32x128xbf16>
    %15 = vector.shape_cast %12 : vector<32x128xbf16> to vector<1x32x128xbf16>
    tpu.vector_store %arg5[%c0_8, %c0_9, %c0_10], %15 {strides = array<i32>} : memref<1x32x128xbf16, #tpu.memory_space<vmem>>, vector<1x32x128xbf16>,
    return
  }
  func.func @transform_0(%arg0: i32, %arg1: i32) -> (i32, i32, i32) {
    %c0_i32 = arith.constant 0 : i32
    %c0_i32_0 = arith.constant 0 : i32
    return %arg0, %c0_i32, %arg1 : i32, i32, i32
  }
  func.func @transform_1(%arg0: i32, %arg1: i32) -> (i32, i32) {
    %c0_i32 = arith.constant 0 : i32
    %c0_i32_0 = arith.constant 0 : i32
    %c0_i32_1 = arith.constant 0 : i32
    return %c0_i32, %c0_i32_0 : i32, i32
  }
  func.func @transform_2(%arg0: i32, %arg1: i32) -> (i32, i32) {
    %c0_i32 = arith.constant 0 : i32
    %c0_i32_0 = arith.constant 0 : i32
    %c0_i32_1 = arith.constant 0 : i32
    return %c0_i32, %c0_i32_0 : i32, i32
  }
  func.func @transform_3(%arg0: i32, %arg1: i32) -> (i32, i32, i32) {
    %c0_i32 = arith.constant 0 : i32
    %c0_i32_0 = arith.constant 0 : i32
    return %arg0, %c0_i32, %arg1 : i32, i32, i32
  }
}

module attributes {stable_mosaic.version = 11 : i64} {
  func.func @_conv_gap_head_kernel(%arg0: i32, %arg1: i32, %arg2: memref<1x288x128xbf16, #tpu.memory_space<vmem>>, %arg3: memref<32x288xbf16, #tpu.memory_space<vmem>>, %arg4: memref<32x1xf32, #tpu.memory_space<vmem>>, %arg5: memref<32x32xf32, #tpu.memory_space<vmem>>, %arg6: memref<32x1xf32, #tpu.memory_space<vmem>>, %arg7: memref<7x32xf32, #tpu.memory_space<vmem>>, %arg8: memref<7x1xf32, #tpu.memory_space<vmem>>, %arg9: memref<1x7x1xf32, #tpu.memory_space<vmem>>, %arg10: memref<32x1xf32, #tpu.memory_space<vmem>>) attributes {dimension_semantics = [#tpu.dimension_semantics<parallel>, #tpu.dimension_semantics<arbitrary>], iteration_bounds = array<i64: 2, 1>, scalar_prefetch = 0 : i64, scratch_operands = 1 : i64, tpu.core_type = #tpu.core_type<tc>, window_params = [{transform_indices = @transform_0, window_bounds = array<i64: 1, 288, 128>}, {pipeline_mode = #tpu.pipeline_mode<synchronous>, transform_indices = @transform_1, window_bounds = array<i64: 32, 288>}, {pipeline_mode = #tpu.pipeline_mode<synchronous>, transform_indices = @transform_2, window_bounds = array<i64: 32, 1>}, {pipeline_mode = #tpu.pipeline_mode<synchronous>, transform_indices = @transform_3, window_bounds = array<i64: 32, 32>}, {pipeline_mode = #tpu.pipeline_mode<synchronous>, transform_indices = @transform_4, window_bounds = array<i64: 32, 1>}, {pipeline_mode = #tpu.pipeline_mode<synchronous>, transform_indices = @transform_5, window_bounds = array<i64: 7, 32>}, {pipeline_mode = #tpu.pipeline_mode<synchronous>, transform_indices = @transform_6, window_bounds = array<i64: 7, 1>}, {transform_indices = @transform_7, window_bounds = array<i64: 1, 7, 1>}]} {
    %c0_i32 = arith.constant 0 : i32
    %0 = arith.cmpi eq, %arg1, %c0_i32 : i32
    %1 = arith.extui %0 : i1 to i32
    %c0_i32_0 = arith.constant 0 : i32
    %2 = arith.cmpi ne, %1, %c0_i32_0 : i32
    scf.if %2 {
      %cst_17 = arith.constant 0.000000e+00 : f32
      %31 = vector.broadcast %cst_17 : f32 to vector<32x1xf32>
      %c0_18 = arith.constant 0 : index
      %c0_19 = arith.constant 0 : index
      %32 = vector.load %arg10[%c0_18, %c0_19] : memref<32x1xf32, #tpu.memory_space<vmem>>, vector<32x1xf32>
      tpu.vector_store %arg10[%c0_18, %c0_19], %31 {strides = array<i32>} : memref<32x1xf32, #tpu.memory_space<vmem>>, vector<32x1xf32>,
    } else {
    }
    %c0 = arith.constant 0 : index
    %c0_1 = arith.constant 0 : index
    %3 = vector.load %arg3[%c0, %c0_1] : memref<32x288xbf16, #tpu.memory_space<vmem>>, vector<32x288xbf16>
    %c0_2 = arith.constant 0 : index
    %c0_3 = arith.constant 0 : index
    %c0_4 = arith.constant 0 : index
    %4 = vector.load %arg2[%c0_2, %c0_3, %c0_4] : memref<1x288x128xbf16, #tpu.memory_space<vmem>>, vector<1x288x128xbf16>
    %5 = vector.shape_cast %4 : vector<1x288x128xbf16> to vector<288x128xbf16>
    %cst = arith.constant dense<0.000000e+00> : vector<32x128xf32>
    %6 = tpu.matmul %3, %5, %cst {dimension_numbers = #tpu.dot_dimension_numbers<[1], [0], [0], [1], [0, 0, 1, 1], [], []>} : vector<32x288xbf16>, vector<288x128xbf16>, vector<32x128xf32> -> vector<32x128xf32>
    %c0_5 = arith.constant 0 : index
    %c0_6 = arith.constant 0 : index
    %7 = vector.load %arg4[%c0_5, %c0_6] : memref<32x1xf32, #tpu.memory_space<vmem>>, vector<32x1xf32>
    %8 = vector.broadcast %7 : vector<32x1xf32> to vector<32x128xf32>
    %9 = arith.addf %6, %8 : vector<32x128xf32>
    %cst_7 = arith.constant 0.000000e+00 : f32
    %10 = vector.broadcast %cst_7 : f32 to vector<32x128xf32>
    %11 = arith.cmpf ogt, %9, %10 : vector<32x128xf32>
    %cst_8 = arith.constant 0.00999999977 : f32
    %12 = vector.broadcast %cst_8 : f32 to vector<32x128xf32>
    %13 = arith.mulf %12, %9 : vector<32x128xf32>
    %14 = arith.select %11, %9, %13 : vector<32x128xi1>, vector<32x128xf32>
    %15 = tpu.iota {dimensions = array<i32: 1>} : vector<32x128xi32>
    %c128_i32 = arith.constant 128 : i32
    %16 = arith.muli %arg1, %c128_i32 : i32
    %17 = vector.broadcast %16 : i32 to vector<32x128xi32>
    %18 = arith.addi %15, %17 : vector<32x128xi32>
    %c16_i32 = arith.constant 16 : i32
    %19 = vector.broadcast %c16_i32 : i32 to vector<32x128xi32>
    %20 = arith.cmpi slt, %18, %19 : vector<32x128xi32>
    %cst_9 = arith.constant 0.000000e+00 : f32
    %21 = vector.broadcast %cst_9 : f32 to vector<32x128xf32>
    %22 = arith.select %20, %14, %21 : vector<32x128xi1>, vector<32x128xf32>
    %c0_10 = arith.constant 0 : index
    %c0_11 = arith.constant 0 : index
    %23 = vector.load %arg10[%c0_10, %c0_11] : memref<32x1xf32, #tpu.memory_space<vmem>>, vector<32x1xf32>
    %cst_12 = arith.constant dense<0.000000e+00> : vector<32xf32>
    %24 = vector.multi_reduction <add>, %22, %cst_12 [1] : vector<32x128xf32> to vector<32xf32>
    %25 = vector.shape_cast %24 : vector<32xf32> to vector<32x1xf32>
    %26 = arith.addf %23, %25 : vector<32x1xf32>
    %c0_13 = arith.constant 0 : index
    %c0_14 = arith.constant 0 : index
    %27 = vector.load %arg10[%c0_13, %c0_14] : memref<32x1xf32, #tpu.memory_space<vmem>>, vector<32x1xf32>
    tpu.vector_store %arg10[%c0_13, %c0_14], %26 {strides = array<i32>} : memref<32x1xf32, #tpu.memory_space<vmem>>, vector<32x1xf32>,
    %c0_i32_15 = arith.constant 0 : i32
    %28 = arith.cmpi eq, %arg1, %c0_i32_15 : i32
    %29 = arith.extui %28 : i1 to i32
    %c0_i32_16 = arith.constant 0 : i32
    %30 = arith.cmpi ne, %29, %c0_i32_16 : i32
    scf.if %30 {
      %c0_17 = arith.constant 0 : index
      %c0_18 = arith.constant 0 : index
      %31 = vector.load %arg10[%c0_17, %c0_18] : memref<32x1xf32, #tpu.memory_space<vmem>>, vector<32x1xf32>
      %cst_19 = arith.constant 6.250000e-02 : f32
      %32 = vector.broadcast %cst_19 : f32 to vector<32x1xf32>
      %33 = arith.mulf %31, %32 : vector<32x1xf32>
      %34 = vector.shape_cast %33 : vector<32x1xf32> to vector<32x1xf32>
      %35 = vector.broadcast %34 : vector<32x1xf32> to vector<32x128xf32>
      %c0_20 = arith.constant 0 : index
      %c0_21 = arith.constant 0 : index
      %36 = vector.load %arg5[%c0_20, %c0_21] : memref<32x32xf32, #tpu.memory_space<vmem>>, vector<32x32xf32>
      %cst_22 = arith.constant dense<0.000000e+00> : vector<32x128xf32>
      %37 = tpu.matmul %36, %35, %cst_22 {dimension_numbers = #tpu.dot_dimension_numbers<[1], [0], [0], [1], [0, 0, 1, 1], [], []>} : vector<32x32xf32>, vector<32x128xf32>, vector<32x128xf32> -> vector<32x128xf32>
      %c0_23 = arith.constant 0 : index
      %c0_24 = arith.constant 0 : index
      %38 = vector.load %arg6[%c0_23, %c0_24] : memref<32x1xf32, #tpu.memory_space<vmem>>, vector<32x1xf32>
      %39 = vector.broadcast %38 : vector<32x1xf32> to vector<32x128xf32>
      %40 = arith.addf %37, %39 : vector<32x128xf32>
      %cst_25 = arith.constant 0.000000e+00 : f32
      %41 = vector.broadcast %cst_25 : f32 to vector<32x128xf32>
      %42 = arith.cmpf ogt, %40, %41 : vector<32x128xf32>
      %cst_26 = arith.constant 0.00999999977 : f32
      %43 = vector.broadcast %cst_26 : f32 to vector<32x128xf32>
      %44 = arith.mulf %43, %40 : vector<32x128xf32>
      %45 = arith.select %42, %40, %44 : vector<32x128xi1>, vector<32x128xf32>
      %c0_27 = arith.constant 0 : index
      %c0_28 = arith.constant 0 : index
      %46 = vector.load %arg7[%c0_27, %c0_28] : memref<7x32xf32, #tpu.memory_space<vmem>>, vector<7x32xf32>
      %cst_29 = arith.constant dense<0.000000e+00> : vector<7x128xf32>
      %47 = tpu.matmul %46, %45, %cst_29 {dimension_numbers = #tpu.dot_dimension_numbers<[1], [0], [0], [1], [0, 0, 1, 1], [], []>} : vector<7x32xf32>, vector<32x128xf32>, vector<7x128xf32> -> vector<7x128xf32>
      %c0_30 = arith.constant 0 : index
      %c0_31 = arith.constant 0 : index
      %48 = vector.load %arg8[%c0_30, %c0_31] : memref<7x1xf32, #tpu.memory_space<vmem>>, vector<7x1xf32>
      %49 = vector.broadcast %48 : vector<7x1xf32> to vector<7x128xf32>
      %50 = arith.addf %47, %49 : vector<7x128xf32>
      %51 = vector.extract_strided_slice %50 {offsets = [0, 0], sizes = [7, 1], strides = [1, 1]} : vector<7x128xf32> to vector<7x1xf32>
      %c0_32 = arith.constant 0 : index
      %c0_33 = arith.constant 0 : index
      %c0_34 = arith.constant 0 : index
      %52 = vector.load %arg9[%c0_32, %c0_33, %c0_34] : memref<1x7x1xf32, #tpu.memory_space<vmem>>, vector<1x7x1xf32>
      %53 = vector.shape_cast %52 : vector<1x7x1xf32> to vector<7x1xf32>
      %54 = vector.shape_cast %51 : vector<7x1xf32> to vector<1x7x1xf32>
      tpu.vector_store %arg9[%c0_32, %c0_33, %c0_34], %54 {strides = array<i32>} : memref<1x7x1xf32, #tpu.memory_space<vmem>>, vector<1x7x1xf32>,
    } else {
    }
    return
  }
  func.func @transform_0(%arg0: i32, %arg1: i32) -> (i32, i32, i32) {
    %c0_i32 = arith.constant 0 : i32
    %c0_i32_0 = arith.constant 0 : i32
    return %arg0, %c0_i32, %arg1 : i32, i32, i32
  }
  func.func @transform_1(%arg0: i32, %arg1: i32) -> (i32, i32) {
    %c0_i32 = arith.constant 0 : i32
    %c0_i32_0 = arith.constant 0 : i32
    %c0_i32_1 = arith.constant 0 : i32
    return %c0_i32, %c0_i32_0 : i32, i32
  }
  func.func @transform_2(%arg0: i32, %arg1: i32) -> (i32, i32) {
    %c0_i32 = arith.constant 0 : i32
    %c0_i32_0 = arith.constant 0 : i32
    %c0_i32_1 = arith.constant 0 : i32
    return %c0_i32, %c0_i32_0 : i32, i32
  }
  func.func @transform_3(%arg0: i32, %arg1: i32) -> (i32, i32) {
    %c0_i32 = arith.constant 0 : i32
    %c0_i32_0 = arith.constant 0 : i32
    %c0_i32_1 = arith.constant 0 : i32
    return %c0_i32, %c0_i32_0 : i32, i32
  }
  func.func @transform_4(%arg0: i32, %arg1: i32) -> (i32, i32) {
    %c0_i32 = arith.constant 0 : i32
    %c0_i32_0 = arith.constant 0 : i32
    %c0_i32_1 = arith.constant 0 : i32
    return %c0_i32, %c0_i32_0 : i32, i32
  }
  func.func @transform_5(%arg0: i32, %arg1: i32) -> (i32, i32) {
    %c0_i32 = arith.constant 0 : i32
    %c0_i32_0 = arith.constant 0 : i32
    %c0_i32_1 = arith.constant 0 : i32
    return %c0_i32, %c0_i32_0 : i32, i32
  }
  func.func @transform_6(%arg0: i32, %arg1: i32) -> (i32, i32) {
    %c0_i32 = arith.constant 0 : i32
    %c0_i32_0 = arith.constant 0 : i32
    %c0_i32_1 = arith.constant 0 : i32
    return %c0_i32, %c0_i32_0 : i32, i32
  }
  func.func @transform_7(%arg0: i32, %arg1: i32) -> (i32, i32, i32) {
    %c0_i32 = arith.constant 0 : i32
    %c0_i32_0 = arith.constant 0 : i32
    %c0_i32_1 = arith.constant 0 : i32
    return %arg0, %c0_i32, %c0_i32_0 : i32, i32, i32
  }
}

</mosaic_0001>

<llo_original>
// kernel: _lambda_.4
$region0: #{_lambda_.4}
  #allocation0 [shape = 'u32[]', space=smem, size = 0x4, offset = 0x4, fixed_abs, tag = 'smem constant byte address 0x4 - core index']
  #allocation1 [shape = 'u32[144,128]{1,0:T(1,128)}', space=vmem, size = 0x12000, scoped, tag = 'internal scratch']
  %s0 = inlined_call_operand.vmem [shape: f32[24], index: 0, kind: input, shape index: {}]
  %s1 = inlined_call_operand.vmem [shape: f32[2,3,2,128], index: 1, kind: input, shape index: {}]
  %s2 = inlined_call_operand.vmem [shape: f32[2,3,2,128], index: 2, kind: output, shape index: {}]
  %s3 = sld [smem:[#allocation0]]
  $region45: #{_lambda_.4} parent=0
    _
  %s5 = ssub.s32 1, %s3
  %s6 = scalar_select 0, %s5, %s3
  $region1: #{_lambda_.4} parent=0
    #allocation2 [shape = 'u8[512]{0}', space=smem, size = 0x200, scoped, tag = 'input window, operand 0, single buffered']
    #allocation3 [shape = 's32[2]{0}', space=sflag, size = 0x8, scoped, tag = 'scoped memory for _lambda_.4']
    %7 = vsyncpa [#allocation3], 0
    loop: start=0, step=1, limit=4
    $region2: #{_lambda_.4} parent=1 // loop_pre_header
      _
    $region3: #{_lambda_.4} parent=1 // loop_header
      %s9 = sphi 0, %s13
      %p10 = scmp.ge.s32.totalorder %s9, 4
      %s16 = sphi 0, %s28
      %s17 = sphi 0, %s24
      %s18 = sphi 0, %s16
      %s19 = sphi 0, %s17
      %s20 = sphi 0, %s18
      %s21 = sphi 0, %s19
      %s29 = sphi 0, %s29
      %s31 = sphi 0, %s29
      %s32 = sphi 0, %s31
      %s46 = sphi 0, %s32
      %s54 = sphi 0, %s56
      %s57 = sphi 0, %s54
      %s58 = sphi 0, %s57
      %s74 = sphi 0, %s58
      %s82 = sphi 0, %s84
      %s85 = sphi 0, %s82
      %s86 = sphi 0, %s85
      %s102 = sphi 0, %s86
    $region4: #{_lambda_.4} parent=1 // loop_header_branch
      %12 = sbr.rel (%p10) target = $region8
    $region5: #{_lambda_.4} parent=1 // loop_body
      %s14 = ssub.s32 %s9, 1
      %s15 = ssub.s32 %s9, 2
      %s22 = sadd.s32 1, %s17
      %p23 = scmp.ge.s32.totalorder %s22, 1
      %s24 = scalar_select %p23, 0, %s22
      %s25 = sadd.s32 1, %s16
      %s26 = scalar_select %p23, %s25, %s16
      %p27 = scmp.ge.s32.totalorder %s26, 2
      %s28 = scalar_select %p27, 0, %s26
      %s30 = sadd.s32 %s29, 1
      %p33 = scmp.eq.s32.totalorder %s9, 1
      %p34 = scmp.ne.s32.totalorder %s29, %s31
      %p35 = scmp.eq.s32.totalorder %s9, 0
      %p36 = por %p34, %p35
      %p37 = scmp.ne.s32.totalorder %s29, %s31
      %p38 = scmp.eq.s32.totalorder %s14, 1
      %p39 = por %p37, %p38
      %p40 = scmp.ne.s32.totalorder %s31, %s32
      %p41 = scmp.eq.s32.totalorder %s14, 0
      %p42 = por %p40, %p41
      %p43 = scmp.ne.s32.totalorder %s31, %s32
      %p44 = scmp.eq.s32.totalorder %s15, 1
      %p45 = por %p43, %p44
      %p47 = scmp.ne.s32.totalorder %s32, %s46
      %p48 = scmp.eq.s32.totalorder %s15, 0
      %p49 = por %p47, %p48
      %s50 = ssub.s32 %s16, %s28
      %s51 = ssub.s32 %s17, %s24
      %s52 = sor.u32 %s50, %s51
      %p53 = scmp.eq.s32.totalorder %s52, 0
      %s55 = sadd.s32 %s54, 1
      %s56 = scalar_select %p53, %s54, %s55
      %p59 = pneg %p53
      %p60 = scmp.eq.s32.totalorder %s9, 1
      %p61 = por %p59, %p60
      %p62 = scmp.ne.s32.totalorder %s54, %s57
      %p63 = scmp.eq.s32.totalorder %s9, 0
      %p64 = por %p62, %p63
      %p65 = scmp.ne.s32.totalorder %s54, %s57
      %p66 = scmp.eq.s32.totalorder %s14, 1
      %p67 = por %p65, %p66
      %p68 = scmp.ne.s32.totalorder %s57, %s58
      %p69 = scmp.eq.s32.totalorder %s14, 0
      %p70 = por %p68, %p69
      %p71 = scmp.ne.s32.totalorder %s57, %s58
      %p72 = scmp.eq.s32.totalorder %s15, 1
      %p73 = por %p71, %p72
      %p75 = scmp.ne.s32.totalorder %s58, %s74
      %p76 = scmp.eq.s32.totalorder %s15, 0
      %p77 = por %p75, %p76
      %s78 = ssub.s32 %s16, %s28
      %s79 = ssub.s32 %s17, %s24
      %s80 = sor.u32 %s78, %s79
      %p81 = scmp.eq.s32.totalorder %s80, 0
      %s83 = sadd.s32 %s82, 1
      %s84 = scalar_select %p81, %s82, %s83
      %p87 = pneg %p81
      %p88 = scmp.eq.s32.totalorder %s9, 1
      %p89 = por %p87, %p88
      %p90 = scmp.ne.s32.totalorder %s82, %s85
      %p91 = scmp.eq.s32.totalorder %s9, 0
      %p92 = por %p90, %p91
      %p93 = scmp.ne.s32.totalorder %s82, %s85
      %p94 = scmp.eq.s32.totalorder %s14, 1
      %p95 = por %p93, %p94
      %p96 = scmp.ne.s32.totalorder %s85, %s86
      %p97 = scmp.eq.s32.totalorder %s14, 0
      %p98 = por %p96, %p97
      %p99 = scmp.ne.s32.totalorder %s85, %s86
      %p100 = scmp.eq.s32.totalorder %s15, 1
      %p101 = por %p99, %p100
      %p103 = scmp.ne.s32.totalorder %s86, %s102
      %p104 = scmp.eq.s32.totalorder %s15, 0
      %p105 = por %p103, %p104
      %p106 = scmp.le.s32.totalorder 1, %s9
      %p107 = scmp.lt.s32.totalorder %s9, 3
      %p108 = pnand %p106, %p107
      %p109 = pneg %p108
      // Predicated region
      $region9: #{_lambda_.4} parent=5 // pred_check
        _
      $region10: #{_lambda_.4} parent=5 // pred_check_branch
        %111 = sbr.rel (%p108) target = $region12
      $region11: #{_lambda_.4} parent=5 // pred_region
        %s112 = ssub.s32 %s9, 1
        // Predicated region
        $region13: #{_lambda_.4} parent=11 // pred_check
          %p113 = pneg %p42
        $region14: #{_lambda_.4} parent=11 // pred_check_branch
          %115 = sbr.rel (%p113) target = $region16
        $region15: #{_lambda_.4} parent=11 // pred_region
          %s117 = ssub.s32 16, 16
          %118 = vsyncadd [#allocation3], %s117
          %s120 = sshll.u32 %s0, 4
          %s121 = int_to_ptr.vmem [resolvable:$true] %s120
          %123 = dma.vmem_to_smem %s121, 16, [#allocation2], [#allocation3]
        $region16: #{_lambda_.4} parent=11 // pred_fallthru
          _
      $region12: #{_lambda_.4} parent=5 // pred_fallthru
        _
      %p124 = scmp.lt.s32.totalorder %s9, 2
      // Predicated region
      $region17: #{_lambda_.4} parent=5 // pred_check
        %p125 = pneg %p124
      $region18: #{_lambda_.4} parent=5 // pred_check_branch
        %127 = sbr.rel (%p125) target = $region20
      $region19: #{_lambda_.4} parent=5 // pred_region
        // Predicated region
        $region21: #{_lambda_.4} parent=19 // pred_check
          %p128 = pneg %p64
        $region22: #{_lambda_.4} parent=19 // pred_check_branch
          %130 = sbr.rel (%p128) target = $region24
        $region23: #{_lambda_.4} parent=19 // pred_region
          %p131 = scmp.lt.s32.totalorder %s16, 1
          %s132 = scalar_select %p131, %s16, 1
          %p133 = scmp.lt.s32.totalorder %s17, 0
          %s134 = scalar_select %p133, %s17, 0
          %s135 = smul.addr %s132, 3
          %s136 = sadd.s32 %s134, %s135
          %s137 = smul.addr %s136, 2
          %s138 = scalar_lea.vmem %s1, %s137
        $region24: #{_lambda_.4} parent=19 // pred_fallthru
          _
      $region20: #{_lambda_.4} parent=5 // pred_fallthru
        _
      %p139 = scmp.le.s32.totalorder 1, %s9
      %p140 = scmp.lt.s32.totalorder %s9, 3
      %p141 = pnand %p139, %p140
      %p142 = pneg %p141
      // Predicated region
      $region25: #{_lambda_.4} parent=5 // pred_check
        _
      $region26: #{_lambda_.4} parent=5 // pred_check_branch
        %144 = sbr.rel (%p141) target = $region28
      $region27: #{_lambda_.4} parent=5 // pred_region
        %s145 = ssub.s32 %s9, 1
        // Predicated region
        $region29: #{_lambda_.4} parent=27 // pred_check
          %p146 = pneg %p42
        $region30: #{_lambda_.4} parent=27 // pred_check_branch
          %148 = sbr.rel (%p146) target = $region32
        $region31: #{_lambda_.4} parent=27 // pred_region
          %149 = dma.done [#allocation3], 16
        $region32: #{_lambda_.4} parent=27 // pred_fallthru
          _
        %150 = sfence
        %p151 = pneg %p42
        %p152 = pneg %p39
        %p153 = scmp.lt.s32.totalorder %s18, 1
        %s154 = scalar_select %p153, %s18, 1
        %p155 = scmp.lt.s32.totalorder %s19, 0
        %s156 = scalar_select %p155, %s19, 0
        %s157 = smul.addr %s154, 3
        %s158 = sadd.s32 %s156, %s157
        %s159 = smul.addr %s158, 2
        %s160 = scalar_lea.vmem %s1, %s159
        %p161 = pneg %p70
        %p162 = pneg %p67
        %p163 = pneg %p98
        %p164 = pneg %p95
        %p165 = scmp.lt.s32.totalorder %s18, 1
        %s166 = scalar_select %p165, %s18, 1
        %p167 = scmp.lt.s32.totalorder %s19, 0
        %s168 = scalar_select %p167, %s19, 0
        %s169 = smul.addr %s166, 3
        %s170 = sadd.s32 %s168, %s169
        %s171 = smul.addr %s170, 2
        %s172 = scalar_lea.vmem %s2, %s171
        %p173 = scmp.lt.s32.totalorder %s18, 1
        %s174 = scalar_select %p173, %s18, 1
        %p175 = scmp.lt.s32.totalorder %s19, 0
        %s176 = scalar_select %p175, %s19, 0
        %s177 = smul.addr %s174, 3
        %s178 = sadd.s32 %s176, %s177
        %s179 = smul.addr %s178, 2
        %s180 = scalar_lea.vmem %s1, %s179
        %p181 = scmp.lt.s32.totalorder %s18, 1
        %s182 = scalar_select %p181, %s18, 1
        %p183 = scmp.lt.s32.totalorder %s19, 0
        %s184 = scalar_select %p183, %s19, 0
        %s185 = smul.addr %s182, 3
        %s186 = sadd.s32 %s184, %s185
        %s187 = smul.addr %s186, 2
        %s188 = scalar_lea.vmem %s2, %s187
        %s189 = smul.u32 %s18, 12
        %s190 = sld [smem:[#allocation2 + %s189]]
        %s191 = sadd.s32 %s189, 1
        %s192 = sld [smem:[#allocation2 + %s191]]
        %s193 = sadd.s32 %s189, 2
        %s194 = sld [smem:[#allocation2 + %s193]]
        %s195 = sadd.s32 %s189, 3
        %s196 = sld [smem:[#allocation2 + %s195]]
        %s197 = sadd.s32 %s189, 4
        %s198 = sld [smem:[#allocation2 + %s197]]
        %s199 = sadd.s32 %s189, 5
        %s200 = sld [smem:[#allocation2 + %s199]]
        %s201 = sadd.s32 %s189, 6
        %s202 = sld [smem:[#allocation2 + %s201]]
        %s203 = sadd.s32 %s189, 7
        %s204 = sld [smem:[#allocation2 + %s203]]
        %s205 = sadd.s32 %s189, 8
        %s206 = sld [smem:[#allocation2 + %s205]]
        %s207 = sadd.s32 %s189, 9
        %s208 = sld [smem:[#allocation2 + %s207]]
        %s209 = sadd.s32 %s189, 10
        %s210 = sld [smem:[#allocation2 + %s209]]
        %s211 = sadd.s32 %s189, 11
        %s212 = sld [smem:[#allocation2 + %s211]]
        %v213 = vld [vmem:[%s180] sm:$0x3]
        %s214 = scalar_lea.vmem %s180, 2
        %v215 = vld [vmem:[%s214] sm:$0x3]
        %s216 = scalar_lea.vmem %s180, 4
        %v217 = vld [vmem:[%s216] sm:$0x3]
        %v218 = vstv %s190
        %v219 = vmul.f32 %v218, %v213
        %v220 = vstv %s192
        %v221 = vmul.f32 %v220, %v215
        %v222 = vadd.f32 %v219, %v221
        %v223 = vstv %s194
        %v224 = vmul.f32 %v223, %v217
        %v225 = vadd.f32 %v222, %v224
        %v226 = vstv %s196
        %v227 = vadd.f32 %v225, %v226
        %v228 = vstv %s198
        %v229 = vmul.f32 %v228, %v213
        %v230 = vstv %s200
        %v231 = vmul.f32 %v230, %v215
        %v232 = vadd.f32 %v229, %v231
        %v233 = vstv %s202
        %v234 = vmul.f32 %v233, %v217
        %v235 = vadd.f32 %v232, %v234
        %v236 = vstv %s204
        %v237 = vadd.f32 %v235, %v236
        %v238 = vstv %s206
        %v239 = vmul.f32 %v238, %v213
        %v240 = vstv %s208
        %v241 = vmul.f32 %v240, %v215
        %v242 = vadd.f32 %v239, %v241
        %v243 = vstv %s210
        %v244 = vmul.f32 %v243, %v217
        %v245 = vadd.f32 %v242, %v244
        %v246 = vstv %s212
        %v247 = vadd.f32 %v245, %v246
        %vm248 = vcmp.gt.f32.partialorder %v247, 1e-06
        %v249 = vsel %vm248, %v247, 1.0
        %v250 = vrcp.pop %v249
        %v251 = vmul.f32 %v227, %v250
        %252 = vst [vmem:[%s188] sm:$0x3] %v251
        %v253 = vmul.f32 %v237, %v250
        %s254 = scalar_lea.vmem %s188, 2
        %255 = vst [vmem:[%s254] sm:$0x3] %v253
        %s256 = scalar_lea.vmem %s188, 4
        %257 = vst [vmem:[%s256] sm:$0x3] %v247
        %p258 = scmp.lt.s32.totalorder %s18, 1
        %s259 = scalar_select %p258, %s18, 1
        %p260 = scmp.lt.s32.totalorder %s19, 0
        %s261 = scalar_select %p260, %s19, 0
        %s262 = smul.addr %s259, 3
        %s263 = sadd.s32 %s261, %s262
        %s264 = smul.addr %s263, 2
        %s265 = scalar_lea.vmem %s2, %s264
        // Predicated region
        $region33: #{_lambda_.4} parent=27 // pred_check
          %p266 = pneg %p95
        $region34: #{_lambda_.4} parent=27 // pred_check_branch
          %268 = sbr.rel (%p266) target = $region36
        $region35: #{_lambda_.4} parent=27 // pred_region
          _
        $region36: #{_lambda_.4} parent=27 // pred_fallthru
          _
      $region28: #{_lambda_.4} parent=5 // pred_fallthru
        _
      %p269 = scmp.le.s32.totalorder 2, %s9
      // Predicated region
      $region37: #{_lambda_.4} parent=5 // pred_check
        %p270 = pneg %p269
      $region38: #{_lambda_.4} parent=5 // pred_check_branch
        %272 = sbr.rel (%p270) target = $region40
      $region39: #{_lambda_.4} parent=5 // pred_region
        %s273 = ssub.s32 %s9, 2
        // Predicated region
        $region41: #{_lambda_.4} parent=39 // pred_check
          %p274 = pneg %p101
        $region42: #{_lambda_.4} parent=39 // pred_check_branch
          %276 = sbr.rel (%p274) target = $region44
        $region43: #{_lambda_.4} parent=39 // pred_region
          %p277 = scmp.lt.s32.totalorder %s20, 1
          %s278 = scalar_select %p277, %s20, 1
          %p279 = scmp.lt.s32.totalorder %s21, 0
          %s280 = scalar_select %p279, %s21, 0
          %s281 = smul.addr %s278, 3
          %s282 = sadd.s32 %s280, %s281
          %s283 = smul.addr %s282, 2
          %s284 = scalar_lea.vmem %s2, %s283
        $region44: #{_lambda_.4} parent=39 // pred_fallthru
          _
      $region40: #{_lambda_.4} parent=5 // pred_fallthru
        _
    $region6: #{_lambda_.4} parent=1 // loop_footer
      %s13 = sadd.s32 1, %s9
    $region7: #{_lambda_.4} parent=1 // loop_footer_branch
      %8 = sbr.rel target = $region3
    $region8: #{_lambda_.4} parent=1 // loop_exit
      _
    %285 = vsyncpa [#allocation3], 1
    %s286 = scalar_lea.sflag [#allocation3], 1
    %287 = vsyncpa %s286, 1

// kernel: _lambda_.5
$region0: #{_lambda_.5}
  #allocation0 [shape = 'u32[]', space=smem, size = 0x4, offset = 0x4, fixed_abs, tag = 'smem constant byte address 0x4 - core index']
  #allocation1 [shape = 'u32[144,128]{1,0:T(1,128)}', space=vmem, size = 0x12000, scoped, tag = 'internal scratch']
  %s0 = inlined_call_operand.vmem [shape: bf16[2,36,128], index: 0, kind: input, shape index: {}]
  %s1 = inlined_call_operand.vmem [shape: bf16[16,36], index: 1, kind: input, shape index: {}]
  %s2 = inlined_call_operand.vmem [shape: f32[16,1], index: 2, kind: input, shape index: {}]
  %s3 = inlined_call_operand.vmem [shape: bf16[2,16,128], index: 3, kind: output, shape index: {}]
  %s4 = sld [smem:[#allocation0]]
  $region45: #{_lambda_.5} parent=0
    _
  %s6 = ssub.s32 1, %s4
  %s7 = scalar_select 0, %s6, %s4
  loop: start=0, step=1, limit=4
  $region2: #{_lambda_.5} parent=0 // loop_pre_header
    _
  $region3: #{_lambda_.5} parent=0 // loop_header
    %s9 = sphi 0, %s13
    %p10 = scmp.ge.s32.totalorder %s9, 4
    %s16 = sphi 0, %s28
    %s17 = sphi 0, %s24
    %s18 = sphi 0, %s16
    %s19 = sphi 0, %s17
    %s20 = sphi 0, %s18
    %s21 = sphi 0, %s19
    %s33 = sphi 0, %s35
    %s36 = sphi 0, %s33
    %s37 = sphi 0, %s36
    %s53 = sphi 0, %s37
    %s57 = sphi 0, %s57
    %s59 = sphi 0, %s57
    %s60 = sphi 0, %s59
    %s74 = sphi 0, %s60
    %s78 = sphi 0, %s78
    %s80 = sphi 0, %s78
    %s81 = sphi 0, %s80
    %s95 = sphi 0, %s81
    %s103 = sphi 0, %s105
    %s106 = sphi 0, %s103
    %s107 = sphi 0, %s106
    %s123 = sphi 0, %s107
  $region4: #{_lambda_.5} parent=0 // loop_header_branch
    %12 = sbr.rel (%p10) target = $region8
  $region5: #{_lambda_.5} parent=0 // loop_body
    %s14 = ssub.s32 %s9, 1
    %s15 = ssub.s32 %s9, 2
    %s22 = sadd.s32 1, %s17
    %p23 = scmp.ge.s32.totalorder %s22, 1
    %s24 = scalar_select %p23, 0, %s22
    %s25 = sadd.s32 1, %s16
    %s26 = scalar_select %p23, %s25, %s16
    %p27 = scmp.ge.s32.totalorder %s26, 2
    %s28 = scalar_select %p27, 0, %s26
    %s29 = ssub.s32 %s16, %s28
    %s30 = ssub.s32 %s17, %s24
    %s31 = sor.u32 %s29, %s30
    %p32 = scmp.eq.s32.totalorder %s31, 0
    %s34 = sadd.s32 %s33, 1
    %s35 = scalar_select %p32, %s33, %s34
    %p38 = pneg %p32
    %p39 = scmp.eq.s32.totalorder %s9, 1
    %p40 = por %p38, %p39
    %p41 = scmp.ne.s32.totalorder %s33, %s36
    %p42 = scmp.eq.s32.totalorder %s9, 0
    %p43 = por %p41, %p42
    %p44 = scmp.ne.s32.totalorder %s33, %s36
    %p45 = scmp.eq.s32.totalorder %s14, 1
    %p46 = por %p44, %p45
    %p47 = scmp.ne.s32.totalorder %s36, %s37
    %p48 = scmp.eq.s32.totalorder %s14, 0
    %p49 = por %p47, %p48
    %p50 = scmp.ne.s32.totalorder %s36, %s37
    %p51 = scmp.eq.s32.totalorder %s15, 1
    %p52 = por %p50, %p51
    %p54 = scmp.ne.s32.totalorder %s37, %s53
    %p55 = scmp.eq.s32.totalorder %s15, 0
    %p56 = por %p54, %p55
    %s58 = sadd.s32 %s57, 1
    %p61 = scmp.eq.s32.totalorder %s9, 1
    %p62 = scmp.ne.s32.totalorder %s57, %s59
    %p63 = scmp.eq.s32.totalorder %s9, 0
    %p64 = por %p62, %p63
    %p65 = scmp.ne.s32.totalorder %s57, %s59
    %p66 = scmp.eq.s32.totalorder %s14, 1
    %p67 = por %p65, %p66
    %p68 = scmp.ne.s32.totalorder %s59, %s60
    %p69 = scmp.eq.s32.totalorder %s14, 0
    %p70 = por %p68, %p69
    %p71 = scmp.ne.s32.totalorder %s59, %s60
    %p72 = scmp.eq.s32.totalorder %s15, 1
    %p73 = por %p71, %p72
    %p75 = scmp.ne.s32.totalorder %s60, %s74
    %p76 = scmp.eq.s32.totalorder %s15, 0
    %p77 = por %p75, %p76
    %s79 = sadd.s32 %s78, 1
    %p82 = scmp.eq.s32.totalorder %s9, 1
    %p83 = scmp.ne.s32.totalorder %s78, %s80
    %p84 = scmp.eq.s32.totalorder %s9, 0
    %p85 = por %p83, %p84
    %p86 = scmp.ne.s32.totalorder %s78, %s80
    %p87 = scmp.eq.s32.totalorder %s14, 1
    %p88 = por %p86, %p87
    %p89 = scmp.ne.s32.totalorder %s80, %s81
    %p90 = scmp.eq.s32.totalorder %s14, 0
    %p91 = por %p89, %p90
    %p92 = scmp.ne.s32.totalorder %s80, %s81
    %p93 = scmp.eq.s32.totalorder %s15, 1
    %p94 = por %p92, %p93
    %p96 = scmp.ne.s32.totalorder %s81, %s95
    %p97 = scmp.eq.s32.totalorder %s15, 0
    %p98 = por %p96, %p97
    %s99 = ssub.s32 %s16, %s28
    %s100 = ssub.s32 %s17, %s24
    %s101 = sor.u32 %s99, %s100
    %p102 = scmp.eq.s32.totalorder %s101, 0
    %s104 = sadd.s32 %s103, 1
    %s105 = scalar_select %p102, %s103, %s104
    %p108 = pneg %p102
    %p109 = scmp.eq.s32.totalorder %s9, 1
    %p110 = por %p108, %p109
    %p111 = scmp.ne.s32.totalorder %s103, %s106
    %p112 = scmp.eq.s32.totalorder %s9, 0
    %p113 = por %p111, %p112
    %p114 = scmp.ne.s32.totalorder %s103, %s106
    %p115 = scmp.eq.s32.totalorder %s14, 1
    %p116 = por %p114, %p115
    %p117 = scmp.ne.s32.totalorder %s106, %s107
    %p118 = scmp.eq.s32.totalorder %s14, 0
    %p119 = por %p117, %p118
    %p120 = scmp.ne.s32.totalorder %s106, %s107
    %p121 = scmp.eq.s32.totalorder %s15, 1
    %p122 = por %p120, %p121
    %p124 = scmp.ne.s32.totalorder %s107, %s123
    %p125 = scmp.eq.s32.totalorder %s15, 0
    %p126 = por %p124, %p125
    %p127 = scmp.le.s32.totalorder 1, %s9
    %p128 = scmp.lt.s32.totalorder %s9, 3
    %p129 = pnand %p127, %p128
    %p130 = pneg %p129
    // Predicated region
    $region9: #{_lambda_.5} parent=5 // pred_check
      _
    $region10: #{_lambda_.5} parent=5 // pred_check_branch
      %132 = sbr.rel (%p129) target = $region12
    $region11: #{_lambda_.5} parent=5 // pred_region
      %s133 = ssub.s32 %s9, 1
      // Predicated region
      $region13: #{_lambda_.5} parent=11 // pred_check
        %p134 = pneg %p70
      $region14: #{_lambda_.5} parent=11 // pred_check_branch
        %136 = sbr.rel (%p134) target = $region16
      $region15: #{_lambda_.5} parent=11 // pred_region
        _
      $region16: #{_lambda_.5} parent=11 // pred_fallthru
        _
      // Predicated region
      $region17: #{_lambda_.5} parent=11 // pred_check
        %p137 = pneg %p91
      $region18: #{_lambda_.5} parent=11 // pred_check_branch
        %139 = sbr.rel (%p137) target = $region20
      $region19: #{_lambda_.5} parent=11 // pred_region
        _
      $region20: #{_lambda_.5} parent=11 // pred_fallthru
        _
    $region12: #{_lambda_.5} parent=5 // pred_fallthru
      _
    %p140 = scmp.lt.s32.totalorder %s9, 2
    // Predicated region
    $region21: #{_lambda_.5} parent=5 // pred_check
      %p141 = pneg %p140
    $region22: #{_lambda_.5} parent=5 // pred_check_branch
      %143 = sbr.rel (%p141) target = $region24
    $region23: #{_lambda_.5} parent=5 // pred_region
      // Predicated region
      $region25: #{_lambda_.5} parent=23 // pred_check
        %p144 = pneg %p43
      $region26: #{_lambda_.5} parent=23 // pred_check_branch
        %146 = sbr.rel (%p144) target = $region28
      $region27: #{_lambda_.5} parent=23 // pred_region
        %p147 = scmp.lt.s32.totalorder %s16, 1
        %s148 = scalar_select %p147, %s16, 1
        %p149 = scmp.lt.s32.totalorder %s17, 0
        %s150 = scalar_select %p149, %s17, 0
        %s151 = smul.addr %s148, 5
        %s152 = sadd.s32 %s150, %s151
        %s153 = smul.addr %s152, 4
        %s154 = scalar_lea.vmem %s0, %s153
      $region28: #{_lambda_.5} parent=23 // pred_fallthru
        _
    $region24: #{_lambda_.5} parent=5 // pred_fallthru
      _
    %p155 = scmp.le.s32.totalorder 1, %s9
    %p156 = scmp.lt.s32.totalorder %s9, 3
    %p157 = pnand %p155, %p156
    %p158 = pneg %p157
    // Predicated region
    $region29: #{_lambda_.5} parent=5 // pred_check
      _
    $region30: #{_lambda_.5} parent=5 // pred_check_branch
      %160 = sbr.rel (%p157) target = $region32
    $region31: #{_lambda_.5} parent=5 // pred_region
      %s161 = ssub.s32 %s9, 1
      %p162 = scmp.lt.s32.totalorder %s18, 1
      %s163 = scalar_select %p162, %s18, 1
      %p164 = scmp.lt.s32.totalorder %s19, 0
      %s165 = scalar_select %p164, %s19, 0
      %s166 = smul.addr %s163, 5
      %s167 = sadd.s32 %s165, %s166
      %s168 = smul.addr %s167, 4
      %s169 = scalar_lea.vmem %s0, %s168
      %p170 = pneg %p49
      %p171 = pneg %p46
      %p172 = pneg %p70
      %p173 = pneg %p67
      %p174 = pneg %p91
      %p175 = pneg %p88
      %p176 = pneg %p119
      %p177 = pneg %p116
      %p178 = scmp.lt.s32.totalorder %s18, 1
      %s179 = scalar_select %p178, %s18, 1
      %p180 = scmp.lt.s32.totalorder %s19, 0
      %s181 = scalar_select %p180, %s19, 0
      %s182 = smul.addr %s179, 2
      %s183 = sadd.s32 %s181, %s182
      %s184 = smul.addr %s183, 4
      %s185 = scalar_lea.vmem %s3, %s184
      %p186 = scmp.lt.s32.totalorder %s18, 1
      %s187 = scalar_select %p186, %s18, 1
      %p188 = scmp.lt.s32.totalorder %s19, 0
      %s189 = scalar_select %p188, %s19, 0
      %s190 = smul.addr %s187, 5
      %s191 = sadd.s32 %s189, %s190
      %s192 = smul.addr %s191, 4
      %s193 = scalar_lea.vmem %s0, %s192
      %p194 = scmp.lt.s32.totalorder %s18, 1
      %s195 = scalar_select %p194, %s18, 1
      %p196 = scmp.lt.s32.totalorder %s19, 0
      %s197 = scalar_select %p196, %s19, 0
      %s198 = smul.addr %s195, 2
      %s199 = sadd.s32 %s197, %s198
      %s200 = smul.addr %s199, 4
      %s201 = scalar_lea.vmem %s3, %s200
      %v203 = vld [vmem:[%s1] sm:$0xf]
      %v204 = vld [vmem:[%s1 + $0x4] sm:$0xf]
      %v205 = vld [vmem:[%s193] sm:$0xf]
      %v206 = vld [vmem:[%s193 + $0x4] sm:$0xf]
      %v207 = vld [vmem:[%s193 + $0x8] sm:$0xf]
      %v208 = vld [vmem:[%s193 + $0xc] sm:$0xf]
      %v209 = vld [vmem:[%s193 + $0x10] sm:$0x3]
      %v210 = vld [vmem:[%s2] sm:$0xff]
      %v211 = vld [vmem:[%s2 + $0x8] sm:$0xff]
      %213 = vset.pattern.permute.xlu0 0
      %214 = vperm.xlu0 %213, %v210
      %v215 = vpop.permute.xlu0 %214
      %218 = vset.pattern.permute.xlu0 0
      %219 = vperm.xlu0 %218, %v211
      %v220 = vpop.permute.xlu0 %219
      %v224 = vunpack.c.l.b16 %v203
      %v225 = vunpack.c.l.b16 %v204
      %v226 = vpack.c.b16 %v225, %v224
      %v232 = vunpack.c.l.b16 %v205
      %v233 = vunpack.c.l.b16 %v206
      %v234 = vunpack.c.l.b16 %v207
      %v235 = vunpack.c.l.b16 %v208
      %v236 = vunpack.c.l.b16 %v209
      %v237 = vpack.c.b16 %v233, %v232
      %v238 = vpack.c.b16 %v235, %v234
      %v239 = vpack.c.b16 %v236, %v236
      %vm242 = vcmask 293888
      %v244 = vsel %vm242, %v226, 0
      %vm246 = vcmask 1041408
      %v248 = vsel %vm246, %v239, 0
      %250 = vmatprep.subr.bf16.mxu0 0
      %251 = vmatpush1.bf16.msra.mxu0 0
      %252 = vmatprep.subr.bf16.mxu0 0
      %253 = vmatpush1.bf16.msra.mxu0 0
      %254 = vmatprep.subr.bf16.mxu0 0
      %255 = vmatpush1.bf16.msra.mxu0 0
      %256 = vmatprep.subr.bf16.mxu0 0
      %257 = vmatpush1.bf16.msra.mxu0 0
      %258 = vmatprep.subr.bf16.mxu0 0
      %259 = vmatpush1.bf16.msra.mxu0 0
      %260 = vmatprep.subr.bf16.mxu0 0
      %261 = vmatpush1.bf16.msra.mxu0 %v248
      %262 = vmatprep.subr.bf16.mxu0 0
      %263 = vmatpush1.bf16.msra.mxu0 %v238
      %264 = vmatprep.subr.bf16.mxu0 0
      %265 = vmatpush1.bf16.msra.mxu0 %v237
      %266 = vmatprep.subr.bf16.mxu0 0
      %267 = vmatpush2.bf16.msra.mxu0 0
      %268 = vmatprep.subr.bf16.mxu0 0
      %269 = vmatpush2.bf16.msra.mxu0 0
      %270 = vmatprep.subr.bf16.mxu0 0
      %271 = vmatpush2.bf16.msra.mxu0 0
      %272 = vmatprep.subr.bf16.mxu0 0
      %273 = vmatpush2.bf16.msra.mxu0 0
      %274 = vmatprep.subr.bf16.mxu0 0
      %275 = vmatpush2.bf16.msra.mxu0 0
      %276 = vmatprep.subr.bf16.mxu0 0
      %277 = vmatpush2.bf16.msra.mxu0 0
      %278 = vmatprep.subr.bf16.mxu0 0
      %279 = vmatpush2.bf16.msra.mxu0 0
      %280 = vmatprep.subr.bf16.mxu0 0
      %281 = vmatpush2.bf16.msra.mxu0 0
      %282 = vmatprep.mubr.bf16.mxu0 0
      %283 = vmatmul.mubr.bf16.gmra.mxu0 %v244
      %v284 = vpop.f32.mrf.mxu0
      %v285 = vadd.f32 %v215, %v284
      %v286 = vpop.f32.mrf.mxu0
      %v287 = vpop.f32.mrf.mxu0
      %v288 = vadd.f32 %v220, %v287
      %v289 = vpop.f32.mrf.mxu0
      %290 = vdwg.mxu0
      %vm291 = vcmp.gt.f32.partialorder %v285, 0.0
      %vm292 = vcmp.gt.f32.partialorder %v288, 0.0
      %v293 = vmul.f32 %v285, 0.01
      %v294 = vmul.f32 %v288, 0.01
      %v295 = vsel %vm291, %v285, %v293
      %v296 = vsel %vm292, %v288, %v294
      %v297 = vpack.c.bf16 %v296, %v295
      %v299 = vunpack.c.l.b16 %v297
      %v300 = vunpack.c.h.b16 %v297
      %v301 = vpack.c.b16 %v299, %v299
      %v302 = vpack.c.b16 %v300, %v300
      %305 = vst [vmem:[%s201] sm:$0xf] %v301
      %306 = vst [vmem:[%s201 + $0x4] sm:$0xf] %v302
      %p307 = scmp.lt.s32.totalorder %s18, 1
      %s308 = scalar_select %p307, %s18, 1
      %p309 = scmp.lt.s32.totalorder %s19, 0
      %s310 = scalar_select %p309, %s19, 0
      %s311 = smul.addr %s308, 2
      %s312 = sadd.s32 %s310, %s311
      %s313 = smul.addr %s312, 4
      %s314 = scalar_lea.vmem %s3, %s313
      // Predicated region
      $region33: #{_lambda_.5} parent=31 // pred_check
        %p315 = pneg %p116
      $region34: #{_lambda_.5} parent=31 // pred_check_branch
        %317 = sbr.rel (%p315) target = $region36
      $region35: #{_lambda_.5} parent=31 // pred_region
        _
      $region36: #{_lambda_.5} parent=31 // pred_fallthru
        _
    $region32: #{_lambda_.5} parent=5 // pred_fallthru
      _
    %p318 = scmp.le.s32.totalorder 2, %s9
    // Predicated region
    $region37: #{_lambda_.5} parent=5 // pred_check
      %p319 = pneg %p318
    $region38: #{_lambda_.5} parent=5 // pred_check_branch
      %321 = sbr.rel (%p319) target = $region40
    $region39: #{_lambda_.5} parent=5 // pred_region
      %s322 = ssub.s32 %s9, 2
      // Predicated region
      $region41: #{_lambda_.5} parent=39 // pred_check
        %p323 = pneg %p122
      $region42: #{_lambda_.5} parent=39 // pred_check_branch
        %325 = sbr.rel (%p323) target = $region44
      $region43: #{_lambda_.5} parent=39 // pred_region
        %p326 = scmp.lt.s32.totalorder %s20, 1
        %s327 = scalar_select %p326, %s20, 1
        %p328 = scmp.lt.s32.totalorder %s21, 0
        %s329 = scalar_select %p328, %s21, 0
        %s330 = smul.addr %s327, 2
        %s331 = sadd.s32 %s329, %s330
        %s332 = smul.addr %s331, 4
        %s333 = scalar_lea.vmem %s3, %s332
      $region44: #{_lambda_.5} parent=39 // pred_fallthru
        _
    $region40: #{_lambda_.5} parent=5 // pred_fallthru
      _
  $region6: #{_lambda_.5} parent=0 // loop_footer
    %s13 = sadd.s32 1, %s9
  $region7: #{_lambda_.5} parent=0 // loop_footer_branch
    %8 = sbr.rel target = $region3
  $region8: #{_lambda_.5} parent=0 // loop_exit
    _

// kernel: _lambda_.6
$region0: #{_lambda_.6}
  #allocation0 [shape = 'u32[]', space=smem, size = 0x4, offset = 0x4, fixed_abs, tag = 'smem constant byte address 0x4 - core index']
  #allocation1 [shape = 'u32[144,128]{1,0:T(1,128)}', space=vmem, size = 0x12000, scoped, tag = 'internal scratch']
  %s0 = inlined_call_operand.vmem [shape: bf16[2,144,128], index: 0, kind: input, shape index: {}]
  %s1 = inlined_call_operand.vmem [shape: bf16[32,144], index: 1, kind: input, shape index: {}]
  %s2 = inlined_call_operand.vmem [shape: f32[32,1], index: 2, kind: input, shape index: {}]
  %s3 = inlined_call_operand.vmem [shape: bf16[2,32,128], index: 3, kind: output, shape index: {}]
  %s4 = sld [smem:[#allocation0]]
  $region45: #{_lambda_.6} parent=0
    _
  %s6 = ssub.s32 1, %s4
  %s7 = scalar_select 0, %s6, %s4
  loop: start=0, step=1, limit=4
  $region2: #{_lambda_.6} parent=0 // loop_pre_header
    _
  $region3: #{_lambda_.6} parent=0 // loop_header
    %s9 = sphi 0, %s13
    %p10 = scmp.ge.s32.totalorder %s9, 4
    %s16 = sphi 0, %s28
    %s17 = sphi 0, %s24
    %s18 = sphi 0, %s16
    %s19 = sphi 0, %s17
    %s20 = sphi 0, %s18
    %s21 = sphi 0, %s19
    %s33 = sphi 0, %s35
    %s36 = sphi 0, %s33
    %s37 = sphi 0, %s36
    %s53 = sphi 0, %s37
    %s57 = sphi 0, %s57
    %s59 = sphi 0, %s57
    %s60 = sphi 0, %s59
    %s74 = sphi 0, %s60
    %s78 = sphi 0, %s78
    %s80 = sphi 0, %s78
    %s81 = sphi 0, %s80
    %s95 = sphi 0, %s81
    %s103 = sphi 0, %s105
    %s106 = sphi 0, %s103
    %s107 = sphi 0, %s106
    %s123 = sphi 0, %s107
  $region4: #{_lambda_.6} parent=0 // loop_header_branch
    %12 = sbr.rel (%p10) target = $region8
  $region5: #{_lambda_.6} parent=0 // loop_body
    %s14 = ssub.s32 %s9, 1
    %s15 = ssub.s32 %s9, 2
    %s22 = sadd.s32 1, %s17
    %p23 = scmp.ge.s32.totalorder %s22, 1
    %s24 = scalar_select %p23, 0, %s22
    %s25 = sadd.s32 1, %s16
    %s26 = scalar_select %p23, %s25, %s16
    %p27 = scmp.ge.s32.totalorder %s26, 2
    %s28 = scalar_select %p27, 0, %s26
    %s29 = ssub.s32 %s16, %s28
    %s30 = ssub.s32 %s17, %s24
    %s31 = sor.u32 %s29, %s30
    %p32 = scmp.eq.s32.totalorder %s31, 0
    %s34 = sadd.s32 %s33, 1
    %s35 = scalar_select %p32, %s33, %s34
    %p38 = pneg %p32
    %p39 = scmp.eq.s32.totalorder %s9, 1
    %p40 = por %p38, %p39
    %p41 = scmp.ne.s32.totalorder %s33, %s36
    %p42 = scmp.eq.s32.totalorder %s9, 0
    %p43 = por %p41, %p42
    %p44 = scmp.ne.s32.totalorder %s33, %s36
    %p45 = scmp.eq.s32.totalorder %s14, 1
    %p46 = por %p44, %p45
    %p47 = scmp.ne.s32.totalorder %s36, %s37
    %p48 = scmp.eq.s32.totalorder %s14, 0
    %p49 = por %p47, %p48
    %p50 = scmp.ne.s32.totalorder %s36, %s37
    %p51 = scmp.eq.s32.totalorder %s15, 1
    %p52 = por %p50, %p51
    %p54 = scmp.ne.s32.totalorder %s37, %s53
    %p55 = scmp.eq.s32.totalorder %s15, 0
    %p56 = por %p54, %p55
    %s58 = sadd.s32 %s57, 1
    %p61 = scmp.eq.s32.totalorder %s9, 1
    %p62 = scmp.ne.s32.totalorder %s57, %s59
    %p63 = scmp.eq.s32.totalorder %s9, 0
    %p64 = por %p62, %p63
    %p65 = scmp.ne.s32.totalorder %s57, %s59
    %p66 = scmp.eq.s32.totalorder %s14, 1
    %p67 = por %p65, %p66
    %p68 = scmp.ne.s32.totalorder %s59, %s60
    %p69 = scmp.eq.s32.totalorder %s14, 0
    %p70 = por %p68, %p69
    %p71 = scmp.ne.s32.totalorder %s59, %s60
    %p72 = scmp.eq.s32.totalorder %s15, 1
    %p73 = por %p71, %p72
    %p75 = scmp.ne.s32.totalorder %s60, %s74
    %p76 = scmp.eq.s32.totalorder %s15, 0
    %p77 = por %p75, %p76
    %s79 = sadd.s32 %s78, 1
    %p82 = scmp.eq.s32.totalorder %s9, 1
    %p83 = scmp.ne.s32.totalorder %s78, %s80
    %p84 = scmp.eq.s32.totalorder %s9, 0
    %p85 = por %p83, %p84
    %p86 = scmp.ne.s32.totalorder %s78, %s80
    %p87 = scmp.eq.s32.totalorder %s14, 1
    %p88 = por %p86, %p87
    %p89 = scmp.ne.s32.totalorder %s80, %s81
    %p90 = scmp.eq.s32.totalorder %s14, 0
    %p91 = por %p89, %p90
    %p92 = scmp.ne.s32.totalorder %s80, %s81
    %p93 = scmp.eq.s32.totalorder %s15, 1
    %p94 = por %p92, %p93
    %p96 = scmp.ne.s32.totalorder %s81, %s95
    %p97 = scmp.eq.s32.totalorder %s15, 0
    %p98 = por %p96, %p97
    %s99 = ssub.s32 %s16, %s28
    %s100 = ssub.s32 %s17, %s24
    %s101 = sor.u32 %s99, %s100
    %p102 = scmp.eq.s32.totalorder %s101, 0
    %s104 = sadd.s32 %s103, 1
    %s105 = scalar_select %p102, %s103, %s104
    %p108 = pneg %p102
    %p109 = scmp.eq.s32.totalorder %s9, 1
    %p110 = por %p108, %p109
    %p111 = scmp.ne.s32.totalorder %s103, %s106
    %p112 = scmp.eq.s32.totalorder %s9, 0
    %p113 = por %p111, %p112
    %p114 = scmp.ne.s32.totalorder %s103, %s106
    %p115 = scmp.eq.s32.totalorder %s14, 1
    %p116 = por %p114, %p115
    %p117 = scmp.ne.s32.totalorder %s106, %s107
    %p118 = scmp.eq.s32.totalorder %s14, 0
    %p119 = por %p117, %p118
    %p120 = scmp.ne.s32.totalorder %s106, %s107
    %p121 = scmp.eq.s32.totalorder %s15, 1
    %p122 = por %p120, %p121
    %p124 = scmp.ne.s32.totalorder %s107, %s123
    %p125 = scmp.eq.s32.totalorder %s15, 0
    %p126 = por %p124, %p125
    %p127 = scmp.le.s32.totalorder 1, %s9
    %p128 = scmp.lt.s32.totalorder %s9, 3
    %p129 = pnand %p127, %p128
    %p130 = pneg %p129
    // Predicated region
    $region9: #{_lambda_.6} parent=5 // pred_check
      _
    $region10: #{_lambda_.6} parent=5 // pred_check_branch
      %132 = sbr.rel (%p129) target = $region12
    $region11: #{_lambda_.6} parent=5 // pred_region
      %s133 = ssub.s32 %s9, 1
      // Predicated region
      $region13: #{_lambda_.6} parent=11 // pred_check
        %p134 = pneg %p70
      $region14: #{_lambda_.6} parent=11 // pred_check_branch
        %136 = sbr.rel (%p134) target = $region16
      $region15: #{_lambda_.6} parent=11 // pred_region
        _
      $region16: #{_lambda_.6} parent=11 // pred_fallthru
        _
      // Predicated region
      $region17: #{_lambda_.6} parent=11 // pred_check
        %p137 = pneg %p91
      $region18: #{_lambda_.6} parent=11 // pred_check_branch
        %139 = sbr.rel (%p137) target = $region20
      $region19: #{_lambda_.6} parent=11 // pred_region
        _
      $region20: #{_lambda_.6} parent=11 // pred_fallthru
        _
    $region12: #{_lambda_.6} parent=5 // pred_fallthru
      _
    %p140 = scmp.lt.s32.totalorder %s9, 2
    // Predicated region
    $region21: #{_lambda_.6} parent=5 // pred_check
      %p141 = pneg %p140
    $region22: #{_lambda_.6} parent=5 // pred_check_branch
      %143 = sbr.rel (%p141) target = $region24
    $region23: #{_lambda_.6} parent=5 // pred_region
      // Predicated region
      $region25: #{_lambda_.6} parent=23 // pred_check
        %p144 = pneg %p43
      $region26: #{_lambda_.6} parent=23 // pred_check_branch
        %146 = sbr.rel (%p144) target = $region28
      $region27: #{_lambda_.6} parent=23 // pred_region
        %p147 = scmp.lt.s32.totalorder %s16, 1
        %s148 = scalar_select %p147, %s16, 1
        %p149 = scmp.lt.s32.totalorder %s17, 0
        %s150 = scalar_select %p149, %s17, 0
        %s151 = smul.addr %s148, 18
        %s152 = sadd.s32 %s150, %s151
        %s153 = smul.addr %s152, 4
        %s154 = scalar_lea.vmem %s0, %s153
      $region28: #{_lambda_.6} parent=23 // pred_fallthru
        _
    $region24: #{_lambda_.6} parent=5 // pred_fallthru
      _
    %p155 = scmp.le.s32.totalorder 1, %s9
    %p156 = scmp.lt.s32.totalorder %s9, 3
    %p157 = pnand %p155, %p156
    %p158 = pneg %p157
    // Predicated region
    $region29: #{_lambda_.6} parent=5 // pred_check
      _
    $region30: #{_lambda_.6} parent=5 // pred_check_branch
      %160 = sbr.rel (%p157) target = $region32
    $region31: #{_lambda_.6} parent=5 // pred_region
      %s161 = ssub.s32 %s9, 1
      %p162 = scmp.lt.s32.totalorder %s18, 1
      %s163 = scalar_select %p162, %s18, 1
      %p164 = scmp.lt.s32.totalorder %s19, 0
      %s165 = scalar_select %p164, %s19, 0
      %s166 = smul.addr %s163, 18
      %s167 = sadd.s32 %s165, %s166
      %s168 = smul.addr %s167, 4
      %s169 = scalar_lea.vmem %s0, %s168
      %p170 = pneg %p49
      %p171 = pneg %p46
      %p172 = pneg %p70
      %p173 = pneg %p67
      %p174 = pneg %p91
      %p175 = pneg %p88
      %p176 = pneg %p119
      %p177 = pneg %p116
      %p178 = scmp.lt.s32.totalorder %s18, 1
      %s179 = scalar_select %p178, %s18, 1
      %p180 = scmp.lt.s32.totalorder %s19, 0
      %s181 = scalar_select %p180, %s19, 0
      %s182 = smul.addr %s179, 4
      %s183 = sadd.s32 %s181, %s182
      %s184 = smul.addr %s183, 4
      %s185 = scalar_lea.vmem %s3, %s184
      %p186 = scmp.lt.s32.totalorder %s18, 1
      %s187 = scalar_select %p186, %s18, 1
      %p188 = scmp.lt.s32.totalorder %s19, 0
      %s189 = scalar_select %p188, %s19, 0
      %s190 = smul.addr %s187, 18
      %s191 = sadd.s32 %s189, %s190
      %s192 = smul.addr %s191, 4
      %s193 = scalar_lea.vmem %s0, %s192
      %p194 = scmp.lt.s32.totalorder %s18, 1
      %s195 = scalar_select %p194, %s18, 1
      %p196 = scmp.lt.s32.totalorder %s19, 0
      %s197 = scalar_select %p196, %s19, 0
      %s198 = smul.addr %s195, 4
      %s199 = sadd.s32 %s197, %s198
      %s200 = smul.addr %s199, 4
      %s201 = scalar_lea.vmem %s3, %s200
      %v203 = vld [vmem:[%s1] sm:$0xff]
      %v204 = vld [vmem:[%s1 + $0x8] sm:$0xff]
      %v205 = vld [vmem:[%s1 + $0x10] sm:$0xff]
      %v206 = vld [vmem:[%s1 + $0x18] sm:$0xff]
      %v207 = vld [vmem:[%s193] sm:$0xf]
      %v208 = vld [vmem:[%s193 + $0x4] sm:$0xf]
      %v209 = vld [vmem:[%s193 + $0x8] sm:$0xf]
      %v210 = vld [vmem:[%s193 + $0xc] sm:$0xf]
      %v211 = vld [vmem:[%s193 + $0x10] sm:$0xf]
      %v212 = vld [vmem:[%s193 + $0x14] sm:$0xf]
      %v213 = vld [vmem:[%s193 + $0x18] sm:$0xf]
      %v214 = vld [vmem:[%s193 + $0x1c] sm:$0xf]
      %v215 = vld [vmem:[%s193 + $0x20] sm:$0xf]
      %v216 = vld [vmem:[%s193 + $0x24] sm:$0xf]
      %v217 = vld [vmem:[%s193 + $0x28] sm:$0xf]
      %v218 = vld [vmem:[%s193 + $0x2c] sm:$0xf]
      %v219 = vld [vmem:[%s193 + $0x30] sm:$0xf]
      %v220 = vld [vmem:[%s193 + $0x34] sm:$0xf]
      %v221 = vld [vmem:[%s193 + $0x38] sm:$0xf]
      %v222 = vld [vmem:[%s193 + $0x3c] sm:$0xf]
      %v223 = vld [vmem:[%s193 + $0x40] sm:$0xf]
      %v224 = vld [vmem:[%s193 + $0x44] sm:$0xf]
      %v225 = vld [vmem:[%s2] sm:$0xff]
      %v226 = vld [vmem:[%s2 + $0x8] sm:$0xff]
      %v227 = vld [vmem:[%s2 + $0x10] sm:$0xff]
      %v228 = vld [vmem:[%s2 + $0x18] sm:$0xff]
      %230 = vset.pattern.permute.xlu0 0
      %231 = vperm.xlu0 %230, %v225
      %v232 = vpop.permute.xlu0 %231
      %235 = vset.pattern.permute.xlu0 0
      %236 = vperm.xlu0 %235, %v226
      %v237 = vpop.permute.xlu0 %236
      %240 = vset.pattern.permute.xlu0 0
      %241 = vperm.xlu0 %240, %v227
      %v242 = vpop.permute.xlu0 %241
      %245 = vset.pattern.permute.xlu0 0
      %246 = vperm.xlu0 %245, %v228
      %v247 = vpop.permute.xlu0 %246
      %v253 = vunpack.c.l.b16 %v203
      %v254 = vunpack.c.h.b16 %v203
      %v255 = vunpack.c.l.b16 %v204
      %v256 = vunpack.c.h.b16 %v204
      %v257 = vunpack.c.l.b16 %v205
      %v258 = vunpack.c.h.b16 %v205
      %v259 = vunpack.c.l.b16 %v206
      %v260 = vunpack.c.h.b16 %v206
      %v261 = vpack.c.b16 %v255, %v253
      %v262 = vpack.c.b16 %v256, %v254
      %v263 = vpack.c.b16 %v259, %v257
      %v264 = vpack.c.b16 %v260, %v258
      %v285 = vunpack.c.l.b16 %v207
      %v286 = vunpack.c.l.b16 %v208
      %v287 = vunpack.c.l.b16 %v209
      %v288 = vunpack.c.l.b16 %v210
      %v289 = vunpack.c.l.b16 %v211
      %v290 = vunpack.c.l.b16 %v212
      %v291 = vunpack.c.l.b16 %v213
      %v292 = vunpack.c.l.b16 %v214
      %v293 = vunpack.c.l.b16 %v215
      %v294 = vunpack.c.l.b16 %v216
      %v295 = vunpack.c.l.b16 %v217
      %v296 = vunpack.c.l.b16 %v218
      %v297 = vunpack.c.l.b16 %v219
      %v298 = vunpack.c.l.b16 %v220
      %v299 = vunpack.c.l.b16 %v221
      %v300 = vunpack.c.l.b16 %v222
      %v301 = vunpack.c.l.b16 %v223
      %v302 = vunpack.c.l.b16 %v224
      %v303 = vpack.c.b16 %v286, %v285
      %v304 = vpack.c.b16 %v288, %v287
      %v305 = vpack.c.b16 %v290, %v289
      %v306 = vpack.c.b16 %v292, %v291
      %v307 = vpack.c.b16 %v294, %v293
      %v308 = vpack.c.b16 %v296, %v295
      %v309 = vpack.c.b16 %v298, %v297
      %v310 = vpack.c.b16 %v300, %v299
      %v311 = vpack.c.b16 %v302, %v301
      %vm321 = vcmask 130048
      %v323 = vsel %vm321, %v262, 0
      %v326 = vsel %vm321, %v264, 0
      %328 = vmatprep.subr.bf16.mxu0 0
      %329 = vmatpush1.bf16.msra.mxu0 %v310
      %330 = vmatprep.subr.bf16.mxu0 0
      %331 = vmatpush1.bf16.msra.mxu0 %v309
      %332 = vmatprep.subr.bf16.mxu0 0
      %333 = vmatpush1.bf16.msra.mxu0 %v308
      %334 = vmatprep.subr.bf16.mxu0 0
      %335 = vmatpush1.bf16.msra.mxu0 %v307
      %336 = vmatprep.subr.bf16.mxu0 0
      %337 = vmatpush1.bf16.msra.mxu0 %v306
      %338 = vmatprep.subr.bf16.mxu0 0
      %339 = vmatpush1.bf16.msra.mxu0 %v305
      %340 = vmatprep.subr.bf16.mxu0 0
      %341 = vmatpush1.bf16.msra.mxu0 %v304
      %342 = vmatprep.subr.bf16.mxu0 0
      %343 = vmatpush1.bf16.msra.mxu0 %v303
      %344 = vmatprep.subr.bf16.mxu0 0
      %345 = vmatpush2.bf16.msra.mxu0 0
      %346 = vmatprep.subr.bf16.mxu0 0
      %347 = vmatpush2.bf16.msra.mxu0 0
      %348 = vmatprep.subr.bf16.mxu0 0
      %349 = vmatpush2.bf16.msra.mxu0 0
      %350 = vmatprep.subr.bf16.mxu0 0
      %351 = vmatpush2.bf16.msra.mxu0 0
      %352 = vmatprep.subr.bf16.mxu0 0
      %353 = vmatpush2.bf16.msra.mxu0 0
      %354 = vmatprep.subr.bf16.mxu0 0
      %355 = vmatpush2.bf16.msra.mxu0 0
      %356 = vmatprep.subr.bf16.mxu0 0
      %357 = vmatpush2.bf16.msra.mxu0 0
      %358 = vmatprep.subr.bf16.mxu0 0
      %359 = vmatpush2.bf16.msra.mxu0 %v311
      %360 = vmatprep.mubr.bf16.mxu0 %v323
      %361 = vmatmul.mubr.bf16.gmra.mxu0 %v261
      %v362 = vpop.f32.mrf.mxu0
      %v363 = vadd.f32 %v232, %v362
      %v364 = vpop.f32.mrf.mxu0
      %v365 = vpop.f32.mrf.mxu0
      %v366 = vadd.f32 %v237, %v365
      %v367 = vpop.f32.mrf.mxu0
      %368 = vmatprep.mubr.bf16.mxu0 %v326
      %369 = vmatmul.mubr.bf16.gmra.mxu0 %v263
      %v370 = vpop.f32.mrf.mxu0
      %v371 = vadd.f32 %v242, %v370
      %v372 = vpop.f32.mrf.mxu0
      %v373 = vpop.f32.mrf.mxu0
      %v374 = vadd.f32 %v247, %v373
      %v375 = vpop.f32.mrf.mxu0
      %376 = vdwg.mxu0
      %vm377 = vcmp.gt.f32.partialorder %v363, 0.0
      %vm378 = vcmp.gt.f32.partialorder %v366, 0.0
      %vm379 = vcmp.gt.f32.partialorder %v371, 0.0
      %vm380 = vcmp.gt.f32.partialorder %v374, 0.0
      %v381 = vmul.f32 %v363, 0.01
      %v382 = vmul.f32 %v366, 0.01
      %v383 = vmul.f32 %v371, 0.01
      %v384 = vmul.f32 %v374, 0.01
      %v385 = vsel %vm377, %v363, %v381
      %v386 = vsel %vm378, %v366, %v382
      %v387 = vsel %vm379, %v371, %v383
      %v388 = vsel %vm380, %v374, %v384
      %v389 = vpack.c.bf16 %v386, %v385
      %v390 = vpack.c.bf16 %v388, %v387
      %v393 = vunpack.c.l.b16 %v389
      %v394 = vunpack.c.h.b16 %v389
      %v395 = vunpack.c.l.b16 %v390
      %v396 = vunpack.c.h.b16 %v390
      %v397 = vpack.c.b16 %v393, %v393
      %v398 = vpack.c.b16 %v394, %v394
      %v399 = vpack.c.b16 %v395, %v395
      %v400 = vpack.c.b16 %v396, %v396
      %405 = vst [vmem:[%s201] sm:$0xf] %v397
      %406 = vst [vmem:[%s201 + $0x4] sm:$0xf] %v398
      %407 = vst [vmem:[%s201 + $0x8] sm:$0xf] %v399
      %408 = vst [vmem:[%s201 + $0xc] sm:$0xf] %v400
      %p409 = scmp.lt.s32.totalorder %s18, 1
      %s410 = scalar_select %p409, %s18, 1
      %p411 = scmp.lt.s32.totalorder %s19, 0
      %s412 = scalar_select %p411, %s19, 0
      %s413 = smul.addr %s410, 4
      %s414 = sadd.s32 %s412, %s413
      %s415 = smul.addr %s414, 4
      %s416 = scalar_lea.vmem %s3, %s415
      // Predicated region
      $region33: #{_lambda_.6} parent=31 // pred_check
        %p417 = pneg %p116
      $region34: #{_lambda_.6} parent=31 // pred_check_branch
        %419 = sbr.rel (%p417) target = $region36
      $region35: #{_lambda_.6} parent=31 // pred_region
        _
      $region36: #{_lambda_.6} parent=31 // pred_fallthru
        _
    $region32: #{_lambda_.6} parent=5 // pred_fallthru
      _
    %p420 = scmp.le.s32.totalorder 2, %s9
    // Predicated region
    $region37: #{_lambda_.6} parent=5 // pred_check
      %p421 = pneg %p420
    $region38: #{_lambda_.6} parent=5 // pred_check_branch
      %423 = sbr.rel (%p421) target = $region40
    $region39: #{_lambda_.6} parent=5 // pred_region
      %s424 = ssub.s32 %s9, 2
      // Predicated region
      $region41: #{_lambda_.6} parent=39 // pred_check
        %p425 = pneg %p122
      $region42: #{_lambda_.6} parent=39 // pred_check_branch
        %427 = sbr.rel (%p425) target = $region44
      $region43: #{_lambda_.6} parent=39 // pred_region
        %p428 = scmp.lt.s32.totalorder %s20, 1
        %s429 = scalar_select %p428, %s20, 1
        %p430 = scmp.lt.s32.totalorder %s21, 0
        %s431 = scalar_select %p430, %s21, 0
        %s432 = smul.addr %s429, 4
        %s433 = sadd.s32 %s431, %s432
        %s434 = smul.addr %s433, 4
        %s435 = scalar_lea.vmem %s3, %s434
      $region44: #{_lambda_.6} parent=39 // pred_fallthru
        _
    $region40: #{_lambda_.6} parent=5 // pred_fallthru
      _
  $region6: #{_lambda_.6} parent=0 // loop_footer
    %s13 = sadd.s32 1, %s9
  $region7: #{_lambda_.6} parent=0 // loop_footer_branch
    %8 = sbr.rel target = $region3
  $region8: #{_lambda_.6} parent=0 // loop_exit
    _

// kernel: _lambda_.7
$region0: #{_lambda_.7}
  #allocation0 [shape = 'u32[]', space=smem, size = 0x4, offset = 0x4, fixed_abs, tag = 'smem constant byte address 0x4 - core index']
  #allocation1 [shape = 'u32[144,128]{1,0:T(1,128)}', space=vmem, size = 0x12000, scoped, tag = 'internal scratch']
  #allocation2 [shape = 'f32[32,1]{1,0:T(8,128)}', space=vmem, size = 0x4000, scoped, tag = 'scratch operand']
  %s0 = inlined_call_operand.vmem [shape: bf16[2,288,128], index: 0, kind: input, shape index: {}]
  %s1 = inlined_call_operand.vmem [shape: bf16[32,288], index: 1, kind: input, shape index: {}]
  %s2 = inlined_call_operand.vmem [shape: f32[32,1], index: 2, kind: input, shape index: {}, may-alias: {2,4}]
  %s3 = inlined_call_operand.vmem [shape: f32[32,32], index: 3, kind: input, shape index: {}]
  %s4 = inlined_call_operand.vmem [shape: f32[32,1], index: 4, kind: input, shape index: {}, may-alias: {2,4}]
  %s5 = inlined_call_operand.vmem [shape: f32[7,32], index: 5, kind: input, shape index: {}]
  %s6 = inlined_call_operand.vmem [shape: f32[7,1], index: 6, kind: input, shape index: {}]
  %s7 = inlined_call_operand.vmem [shape: f32[2,7,1], index: 7, kind: output, shape index: {}]
  %s8 = sld [smem:[#allocation0]]
  $region69: #{_lambda_.7} parent=0
    _
  %s10 = ssub.s32 1, %s8
  %s11 = scalar_select 0, %s10, %s8
  loop: start=0, step=1, limit=4
  $region2: #{_lambda_.7} parent=0 // loop_pre_header
    _
  $region3: #{_lambda_.7} parent=0 // loop_header
    %s13 = sphi 0, %s17
    %p14 = scmp.ge.s32.totalorder %s13, 4
    %s20 = sphi 0, %s32
    %s21 = sphi 0, %s28
    %s22 = sphi 0, %s20
    %s23 = sphi 0, %s21
    %s24 = sphi 0, %s22
    %s25 = sphi 0, %s23
    %s37 = sphi 0, %s39
    %s40 = sphi 0, %s37
    %s41 = sphi 0, %s40
    %s57 = sphi 0, %s41
    %s61 = sphi 0, %s61
    %s63 = sphi 0, %s61
    %s64 = sphi 0, %s63
    %s78 = sphi 0, %s64
    %s82 = sphi 0, %s82
    %s84 = sphi 0, %s82
    %s85 = sphi 0, %s84
    %s99 = sphi 0, %s85
    %s103 = sphi 0, %s103
    %s105 = sphi 0, %s103
    %s106 = sphi 0, %s105
    %s120 = sphi 0, %s106
    %s124 = sphi 0, %s124
    %s126 = sphi 0, %s124
    %s127 = sphi 0, %s126
    %s141 = sphi 0, %s127
    %s145 = sphi 0, %s145
    %s147 = sphi 0, %s145
    %s148 = sphi 0, %s147
    %s162 = sphi 0, %s148
    %s166 = sphi 0, %s166
    %s168 = sphi 0, %s166
    %s169 = sphi 0, %s168
    %s183 = sphi 0, %s169
    %s189 = sphi 0, %s191
    %s192 = sphi 0, %s189
    %s193 = sphi 0, %s192
    %s209 = sphi 0, %s193
  $region4: #{_lambda_.7} parent=0 // loop_header_branch
    %16 = sbr.rel (%p14) target = $region8
  $region5: #{_lambda_.7} parent=0 // loop_body
    %s18 = ssub.s32 %s13, 1
    %s19 = ssub.s32 %s13, 2
    %s26 = sadd.s32 1, %s21
    %p27 = scmp.ge.s32.totalorder %s26, 1
    %s28 = scalar_select %p27, 0, %s26
    %s29 = sadd.s32 1, %s20
    %s30 = scalar_select %p27, %s29, %s20
    %p31 = scmp.ge.s32.totalorder %s30, 2
    %s32 = scalar_select %p31, 0, %s30
    %s33 = ssub.s32 %s20, %s32
    %s34 = ssub.s32 %s21, %s28
    %s35 = sor.u32 %s33, %s34
    %p36 = scmp.eq.s32.totalorder %s35, 0
    %s38 = sadd.s32 %s37, 1
    %s39 = scalar_select %p36, %s37, %s38
    %p42 = pneg %p36
    %p43 = scmp.eq.s32.totalorder %s13, 1
    %p44 = por %p42, %p43
    %p45 = scmp.ne.s32.totalorder %s37, %s40
    %p46 = scmp.eq.s32.totalorder %s13, 0
    %p47 = por %p45, %p46
    %p48 = scmp.ne.s32.totalorder %s37, %s40
    %p49 = scmp.eq.s32.totalorder %s18, 1
    %p50 = por %p48, %p49
    %p51 = scmp.ne.s32.totalorder %s40, %s41
    %p52 = scmp.eq.s32.totalorder %s18, 0
    %p53 = por %p51, %p52
    %p54 = scmp.ne.s32.totalorder %s40, %s41
    %p55 = scmp.eq.s32.totalorder %s19, 1
    %p56 = por %p54, %p55
    %p58 = scmp.ne.s32.totalorder %s41, %s57
    %p59 = scmp.eq.s32.totalorder %s19, 0
    %p60 = por %p58, %p59
    %s62 = sadd.s32 %s61, 1
    %p65 = scmp.eq.s32.totalorder %s13, 1
    %p66 = scmp.ne.s32.totalorder %s61, %s63
    %p67 = scmp.eq.s32.totalorder %s13, 0
    %p68 = por %p66, %p67
    %p69 = scmp.ne.s32.totalorder %s61, %s63
    %p70 = scmp.eq.s32.totalorder %s18, 1
    %p71 = por %p69, %p70
    %p72 = scmp.ne.s32.totalorder %s63, %s64
    %p73 = scmp.eq.s32.totalorder %s18, 0
    %p74 = por %p72, %p73
    %p75 = scmp.ne.s32.totalorder %s63, %s64
    %p76 = scmp.eq.s32.totalorder %s19, 1
    %p77 = por %p75, %p76
    %p79 = scmp.ne.s32.totalorder %s64, %s78
    %p80 = scmp.eq.s32.totalorder %s19, 0
    %p81 = por %p79, %p80
    %s83 = sadd.s32 %s82, 1
    %p86 = scmp.eq.s32.totalorder %s13, 1
    %p87 = scmp.ne.s32.totalorder %s82, %s84
    %p88 = scmp.eq.s32.totalorder %s13, 0
    %p89 = por %p87, %p88
    %p90 = scmp.ne.s32.totalorder %s82, %s84
    %p91 = scmp.eq.s32.totalorder %s18, 1
    %p92 = por %p90, %p91
    %p93 = scmp.ne.s32.totalorder %s84, %s85
    %p94 = scmp.eq.s32.totalorder %s18, 0
    %p95 = por %p93, %p94
    %p96 = scmp.ne.s32.totalorder %s84, %s85
    %p97 = scmp.eq.s32.totalorder %s19, 1
    %p98 = por %p96, %p97
    %p100 = scmp.ne.s32.totalorder %s85, %s99
    %p101 = scmp.eq.s32.totalorder %s19, 0
    %p102 = por %p100, %p101
    %s104 = sadd.s32 %s103, 1
    %p107 = scmp.eq.s32.totalorder %s13, 1
    %p108 = scmp.ne.s32.totalorder %s103, %s105
    %p109 = scmp.eq.s32.totalorder %s13, 0
    %p110 = por %p108, %p109
    %p111 = scmp.ne.s32.totalorder %s103, %s105
    %p112 = scmp.eq.s32.totalorder %s18, 1
    %p113 = por %p111, %p112
    %p114 = scmp.ne.s32.totalorder %s105, %s106
    %p115 = scmp.eq.s32.totalorder %s18, 0
    %p116 = por %p114, %p115
    %p117 = scmp.ne.s32.totalorder %s105, %s106
    %p118 = scmp.eq.s32.totalorder %s19, 1
    %p119 = por %p117, %p118
    %p121 = scmp.ne.s32.totalorder %s106, %s120
    %p122 = scmp.eq.s32.totalorder %s19, 0
    %p123 = por %p121, %p122
    %s125 = sadd.s32 %s124, 1
    %p128 = scmp.eq.s32.totalorder %s13, 1
    %p129 = scmp.ne.s32.totalorder %s124, %s126
    %p130 = scmp.eq.s32.totalorder %s13, 0
    %p131 = por %p129, %p130
    %p132 = scmp.ne.s32.totalorder %s124, %s126
    %p133 = scmp.eq.s32.totalorder %s18, 1
    %p134 = por %p132, %p133
    %p135 = scmp.ne.s32.totalorder %s126, %s127
    %p136 = scmp.eq.s32.totalorder %s18, 0
    %p137 = por %p135, %p136
    %p138 = scmp.ne.s32.totalorder %s126, %s127
    %p139 = scmp.eq.s32.totalorder %s19, 1
    %p140 = por %p138, %p139
    %p142 = scmp.ne.s32.totalorder %s127, %s141
    %p143 = scmp.eq.s32.totalorder %s19, 0
    %p144 = por %p142, %p143
    %s146 = sadd.s32 %s145, 1
    %p149 = scmp.eq.s32.totalorder %s13, 1
    %p150 = scmp.ne.s32.totalorder %s145, %s147
    %p151 = scmp.eq.s32.totalorder %s13, 0
    %p152 = por %p150, %p151
    %p153 = scmp.ne.s32.totalorder %s145, %s147
    %p154 = scmp.eq.s32.totalorder %s18, 1
    %p155 = por %p153, %p154
    %p156 = scmp.ne.s32.totalorder %s147, %s148
    %p157 = scmp.eq.s32.totalorder %s18, 0
    %p158 = por %p156, %p157
    %p159 = scmp.ne.s32.totalorder %s147, %s148
    %p160 = scmp.eq.s32.totalorder %s19, 1
    %p161 = por %p159, %p160
    %p163 = scmp.ne.s32.totalorder %s148, %s162
    %p164 = scmp.eq.s32.totalorder %s19, 0
    %p165 = por %p163, %p164
    %s167 = sadd.s32 %s166, 1
    %p170 = scmp.eq.s32.totalorder %s13, 1
    %p171 = scmp.ne.s32.totalorder %s166, %s168
    %p172 = scmp.eq.s32.totalorder %s13, 0
    %p173 = por %p171, %p172
    %p174 = scmp.ne.s32.totalorder %s166, %s168
    %p175 = scmp.eq.s32.totalorder %s18, 1
    %p176 = por %p174, %p175
    %p177 = scmp.ne.s32.totalorder %s168, %s169
    %p178 = scmp.eq.s32.totalorder %s18, 0
    %p179 = por %p177, %p178
    %p180 = scmp.ne.s32.totalorder %s168, %s169
    %p181 = scmp.eq.s32.totalorder %s19, 1
    %p182 = por %p180, %p181
    %p184 = scmp.ne.s32.totalorder %s169, %s183
    %p185 = scmp.eq.s32.totalorder %s19, 0
    %p186 = por %p184, %p185
    %s187 = ssub.s32 %s20, %s32
    %p188 = scmp.eq.s32.totalorder %s187, 0
    %s190 = sadd.s32 %s189, 1
    %s191 = scalar_select %p188, %s189, %s190
    %p194 = pneg %p188
    %p195 = scmp.eq.s32.totalorder %s13, 1
    %p196 = por %p194, %p195
    %p197 = scmp.ne.s32.totalorder %s189, %s192
    %p198 = scmp.eq.s32.totalorder %s13, 0
    %p199 = por %p197, %p198
    %p200 = scmp.ne.s32.totalorder %s189, %s192
    %p201 = scmp.eq.s32.totalorder %s18, 1
    %p202 = por %p200, %p201
    %p203 = scmp.ne.s32.totalorder %s192, %s193
    %p204 = scmp.eq.s32.totalorder %s18, 0
    %p205 = por %p203, %p204
    %p206 = scmp.ne.s32.totalorder %s192, %s193
    %p207 = scmp.eq.s32.totalorder %s19, 1
    %p208 = por %p206, %p207
    %p210 = scmp.ne.s32.totalorder %s193, %s209
    %p211 = scmp.eq.s32.totalorder %s19, 0
    %p212 = por %p210, %p211
    %p213 = scmp.le.s32.totalorder 1, %s13
    %p214 = scmp.lt.s32.totalorder %s13, 3
    %p215 = pnand %p213, %p214
    %p216 = pneg %p215
    // Predicated region
    $region9: #{_lambda_.7} parent=5 // pred_check
      _
    $region10: #{_lambda_.7} parent=5 // pred_check_branch
      %218 = sbr.rel (%p215) target = $region12
    $region11: #{_lambda_.7} parent=5 // pred_region
      %s219 = ssub.s32 %s13, 1
      // Predicated region
      $region13: #{_lambda_.7} parent=11 // pred_check
        %p220 = pneg %p74
      $region14: #{_lambda_.7} parent=11 // pred_check_branch
        %222 = sbr.rel (%p220) target = $region16
      $region15: #{_lambda_.7} parent=11 // pred_region
        _
      $region16: #{_lambda_.7} parent=11 // pred_fallthru
        _
      // Predicated region
      $region17: #{_lambda_.7} parent=11 // pred_check
        %p223 = pneg %p95
      $region18: #{_lambda_.7} parent=11 // pred_check_branch
        %225 = sbr.rel (%p223) target = $region20
      $region19: #{_lambda_.7} parent=11 // pred_region
        _
      $region20: #{_lambda_.7} parent=11 // pred_fallthru
        _
      // Predicated region
      $region21: #{_lambda_.7} parent=11 // pred_check
        %p226 = pneg %p116
      $region22: #{_lambda_.7} parent=11 // pred_check_branch
        %228 = sbr.rel (%p226) target = $region24
      $region23: #{_lambda_.7} parent=11 // pred_region
        _
      $region24: #{_lambda_.7} parent=11 // pred_fallthru
        _
      // Predicated region
      $region25: #{_lambda_.7} parent=11 // pred_check
        %p229 = pneg %p137
      $region26: #{_lambda_.7} parent=11 // pred_check_branch
        %231 = sbr.rel (%p229) target = $region28
      $region27: #{_lambda_.7} parent=11 // pred_region
        _
      $region28: #{_lambda_.7} parent=11 // pred_fallthru
        _
      // Predicated region
      $region29: #{_lambda_.7} parent=11 // pred_check
        %p232 = pneg %p158
      $region30: #{_lambda_.7} parent=11 // pred_check_branch
        %234 = sbr.rel (%p232) target = $region32
      $region31: #{_lambda_.7} parent=11 // pred_region
        _
      $region32: #{_lambda_.7} parent=11 // pred_fallthru
        _
      // Predicated region
      $region33: #{_lambda_.7} parent=11 // pred_check
        %p235 = pneg %p179
      $region34: #{_lambda_.7} parent=11 // pred_check_branch
        %237 = sbr.rel (%p235) target = $region36
      $region35: #{_lambda_.7} parent=11 // pred_region
        _
      $region36: #{_lambda_.7} parent=11 // pred_fallthru
        _
    $region12: #{_lambda_.7} parent=5 // pred_fallthru
      _
    %p238 = scmp.lt.s32.totalorder %s13, 2
    // Predicated region
    $region37: #{_lambda_.7} parent=5 // pred_check
      %p239 = pneg %p238
    $region38: #{_lambda_.7} parent=5 // pred_check_branch
      %241 = sbr.rel (%p239) target = $region40
    $region39: #{_lambda_.7} parent=5 // pred_region
      // Predicated region
      $region41: #{_lambda_.7} parent=39 // pred_check
        %p242 = pneg %p47
      $region42: #{_lambda_.7} parent=39 // pred_check_branch
        %244 = sbr.rel (%p242) target = $region44
      $region43: #{_lambda_.7} parent=39 // pred_region
        %p245 = scmp.lt.s32.totalorder %s20, 1
        %s246 = scalar_select %p245, %s20, 1
        %p247 = scmp.lt.s32.totalorder %s21, 0
        %s248 = scalar_select %p247, %s21, 0
        %s249 = smul.addr %s246, 36
        %s250 = sadd.s32 %s248, %s249
        %s251 = smul.addr %s250, 4
        %s252 = scalar_lea.vmem %s0, %s251
      $region44: #{_lambda_.7} parent=39 // pred_fallthru
        _
    $region40: #{_lambda_.7} parent=5 // pred_fallthru
      _
    %p253 = scmp.le.s32.totalorder 1, %s13
    %p254 = scmp.lt.s32.totalorder %s13, 3
    %p255 = pnand %p253, %p254
    %p256 = pneg %p255
    // Predicated region
    $region45: #{_lambda_.7} parent=5 // pred_check
      _
    $region46: #{_lambda_.7} parent=5 // pred_check_branch
      %258 = sbr.rel (%p255) target = $region48
    $region47: #{_lambda_.7} parent=5 // pred_region
      %s259 = ssub.s32 %s13, 1
      %p260 = scmp.lt.s32.totalorder %s22, 1
      %s261 = scalar_select %p260, %s22, 1
      %p262 = scmp.lt.s32.totalorder %s23, 0
      %s263 = scalar_select %p262, %s23, 0
      %s264 = smul.addr %s261, 36
      %s265 = sadd.s32 %s263, %s264
      %s266 = smul.addr %s265, 4
      %s267 = scalar_lea.vmem %s0, %s266
      %p268 = pneg %p53
      %p269 = pneg %p50
      %p270 = pneg %p74
      %p271 = pneg %p71
      %p272 = pneg %p95
      %p273 = pneg %p92
      %p274 = pneg %p116
      %p275 = pneg %p113
      %p276 = pneg %p137
      %p277 = pneg %p134
      %p278 = pneg %p158
      %p279 = pneg %p155
      %p280 = pneg %p179
      %p281 = pneg %p176
      %p282 = pneg %p205
      %p283 = pneg %p202
      %p284 = scmp.lt.s32.totalorder %s22, 1
      %s285 = scalar_select %p284, %s22, 1
      %s286 = smul.addr %s285, 8
      %s287 = scalar_lea.vmem %s7, %s286
      %p288 = scmp.lt.s32.totalorder %s22, 1
      %s289 = scalar_select %p288, %s22, 1
      %p290 = scmp.lt.s32.totalorder %s23, 0
      %s291 = scalar_select %p290, %s23, 0
      %s292 = smul.addr %s289, 36
      %s293 = sadd.s32 %s291, %s292
      %s294 = smul.addr %s293, 4
      %s295 = scalar_lea.vmem %s0, %s294
      %p296 = scmp.lt.s32.totalorder %s22, 1
      %s297 = scalar_select %p296, %s22, 1
      %s298 = smul.addr %s297, 8
      %s299 = scalar_lea.vmem %s7, %s298
      %p301 = scmp.eq.s32.totalorder %s23, 0
      // Predicated region
      $region49: #{_lambda_.7} parent=47 // pred_check
        %p302 = pneg %p301
      $region50: #{_lambda_.7} parent=47 // pred_check_branch
        %304 = sbr.rel (%p302) target = $region52
      $region51: #{_lambda_.7} parent=47 // pred_region
        %vm305 = vcmask 7168
        %306 = vst.msk [vmem:[#allocation2] sm:$0xff] %vm305, 0.0
        %307 = vst.msk [vmem:[#allocation2 + $0x8] sm:$0xff] %vm305, 0.0
        %308 = vst.msk [vmem:[#allocation2 + $0x10] sm:$0xff] %vm305, 0.0
        %309 = vst.msk [vmem:[#allocation2 + $0x18] sm:$0xff] %vm305, 0.0
      $region52: #{_lambda_.7} parent=47 // pred_fallthru
        _
      %v310 = vld [vmem:[%s1] sm:$0xff]
      %v311 = vld [vmem:[%s1 + $0x8] sm:$0xf]
      %v312 = vld [vmem:[%s1 + $0xc] sm:$0xff]
      %v313 = vld [vmem:[%s1 + $0x14] sm:$0xf]
      %v314 = vld [vmem:[%s1 + $0x18] sm:$0xff]
      %v315 = vld [vmem:[%s1 + $0x20] sm:$0xf]
      %v316 = vld [vmem:[%s1 + $0x24] sm:$0xff]
      %v317 = vld [vmem:[%s1 + $0x2c] sm:$0xf]
      %v318 = vld [vmem:[%s295] sm:$0xf]
      %v319 = vld [vmem:[%s295 + $0x4] sm:$0xf]
      %v320 = vld [vmem:[%s295 + $0x8] sm:$0xf]
      %v321 = vld [vmem:[%s295 + $0xc] sm:$0xf]
      %v322 = vld [vmem:[%s295 + $0x10] sm:$0xf]
      %v323 = vld [vmem:[%s295 + $0x14] sm:$0xf]
      %v324 = vld [vmem:[%s295 + $0x18] sm:$0xf]
      %v325 = vld [vmem:[%s295 + $0x1c] sm:$0xf]
      %v326 = vld [vmem:[%s295 + $0x20] sm:$0xf]
      %v327 = vld [vmem:[%s295 + $0x24] sm:$0xf]
      %v328 = vld [vmem:[%s295 + $0x28] sm:$0xf]
      %v329 = vld [vmem:[%s295 + $0x2c] sm:$0xf]
      %v330 = vld [vmem:[%s295 + $0x30] sm:$0xf]
      %v331 = vld [vmem:[%s295 + $0x34] sm:$0xf]
      %v332 = vld [vmem:[%s295 + $0x38] sm:$0xf]
      %v333 = vld [vmem:[%s295 + $0x3c] sm:$0xf]
      %v334 = vld [vmem:[%s295 + $0x40] sm:$0xf]
      %v335 = vld [vmem:[%s295 + $0x44] sm:$0xf]
      %v336 = vld [vmem:[%s295 + $0x48] sm:$0xf]
      %v337 = vld [vmem:[%s295 + $0x4c] sm:$0xf]
      %v338 = vld [vmem:[%s295 + $0x50] sm:$0xf]
      %v339 = vld [vmem:[%s295 + $0x54] sm:$0xf]
      %v340 = vld [vmem:[%s295 + $0x58] sm:$0xf]
      %v341 = vld [vmem:[%s295 + $0x5c] sm:$0xf]
      %v342 = vld [vmem:[%s295 + $0x60] sm:$0xf]
      %v343 = vld [vmem:[%s295 + $0x64] sm:$0xf]
      %v344 = vld [vmem:[%s295 + $0x68] sm:$0xf]
      %v345 = vld [vmem:[%s295 + $0x6c] sm:$0xf]
      %v346 = vld [vmem:[%s295 + $0x70] sm:$0xf]
      %v347 = vld [vmem:[%s295 + $0x74] sm:$0xf]
      %v348 = vld [vmem:[%s295 + $0x78] sm:$0xf]
      %v349 = vld [vmem:[%s295 + $0x7c] sm:$0xf]
      %v350 = vld [vmem:[%s295 + $0x80] sm:$0xf]
      %v351 = vld [vmem:[%s295 + $0x84] sm:$0xf]
      %v352 = vld [vmem:[%s295 + $0x88] sm:$0xf]
      %v353 = vld [vmem:[%s295 + $0x8c] sm:$0xf]
      %v354 = vld [vmem:[%s2] sm:$0xff]
      %v355 = vld [vmem:[%s2 + $0x8] sm:$0xff]
      %v356 = vld [vmem:[%s2 + $0x10] sm:$0xff]
      %v357 = vld [vmem:[%s2 + $0x18] sm:$0xff]
      %359 = vset.pattern.permute.xlu0 0
      %360 = vperm.xlu0 %359, %v354
      %v361 = vpop.permute.xlu0 %360
      %364 = vset.pattern.permute.xlu0 0
      %365 = vperm.xlu0 %364, %v355
      %v366 = vpop.permute.xlu0 %365
      %369 = vset.pattern.permute.xlu0 0
      %370 = vperm.xlu0 %369, %v356
      %v371 = vpop.permute.xlu0 %370
      %374 = vset.pattern.permute.xlu0 0
      %375 = vperm.xlu0 %374, %v357
      %v376 = vpop.permute.xlu0 %375
      %v386 = vunpack.c.l.b16 %v310
      %v387 = vunpack.c.h.b16 %v310
      %v388 = vunpack.c.l.b16 %v311
      %v389 = vunpack.c.l.b16 %v312
      %v390 = vunpack.c.h.b16 %v312
      %v391 = vunpack.c.l.b16 %v313
      %v392 = vunpack.c.l.b16 %v314
      %v393 = vunpack.c.h.b16 %v314
      %v394 = vunpack.c.l.b16 %v315
      %v395 = vunpack.c.l.b16 %v316
      %v396 = vunpack.c.h.b16 %v316
      %v397 = vunpack.c.l.b16 %v317
      %v398 = vpack.c.b16 %v389, %v386
      %v399 = vpack.c.b16 %v390, %v387
      %v400 = vpack.c.b16 %v391, %v388
      %v401 = vpack.c.b16 %v395, %v392
      %v402 = vpack.c.b16 %v396, %v393
      %v403 = vpack.c.b16 %v397, %v394
      %v444 = vunpack.c.l.b16 %v318
      %v445 = vunpack.c.l.b16 %v319
      %v446 = vunpack.c.l.b16 %v320
      %v447 = vunpack.c.l.b16 %v321
      %v448 = vunpack.c.l.b16 %v322
      %v449 = vunpack.c.l.b16 %v323
      %v450 = vunpack.c.l.b16 %v324
      %v451 = vunpack.c.l.b16 %v325
      %v452 = vunpack.c.l.b16 %v326
      %v453 = vunpack.c.l.b16 %v327
      %v454 = vunpack.c.l.b16 %v328
      %v455 = vunpack.c.l.b16 %v329
      %v456 = vunpack.c.l.b16 %v330
      %v457 = vunpack.c.l.b16 %v331
      %v458 = vunpack.c.l.b16 %v332
      %v459 = vunpack.c.l.b16 %v333
      %v460 = vunpack.c.l.b16 %v334
      %v461 = vunpack.c.l.b16 %v335
      %v462 = vunpack.c.l.b16 %v336
      %v463 = vunpack.c.l.b16 %v337
      %v464 = vunpack.c.l.b16 %v338
      %v465 = vunpack.c.l.b16 %v339
      %v466 = vunpack.c.l.b16 %v340
      %v467 = vunpack.c.l.b16 %v341
      %v468 = vunpack.c.l.b16 %v342
      %v469 = vunpack.c.l.b16 %v343
      %v470 = vunpack.c.l.b16 %v344
      %v471 = vunpack.c.l.b16 %v345
      %v472 = vunpack.c.l.b16 %v346
      %v473 = vunpack.c.l.b16 %v347
      %v474 = vunpack.c.l.b16 %v348
      %v475 = vunpack.c.l.b16 %v349
      %v476 = vunpack.c.l.b16 %v350
      %v477 = vunpack.c.l.b16 %v351
      %v478 = vunpack.c.l.b16 %v352
      %v479 = vunpack.c.l.b16 %v353
      %v480 = vpack.c.b16 %v445, %v444
      %v481 = vpack.c.b16 %v447, %v446
      %v482 = vpack.c.b16 %v449, %v448
      %v483 = vpack.c.b16 %v451, %v450
      %v484 = vpack.c.b16 %v453, %v452
      %v485 = vpack.c.b16 %v455, %v454
      %v486 = vpack.c.b16 %v457, %v456
      %v487 = vpack.c.b16 %v459, %v458
      %v488 = vpack.c.b16 %v461, %v460
      %v489 = vpack.c.b16 %v463, %v462
      %v490 = vpack.c.b16 %v465, %v464
      %v491 = vpack.c.b16 %v467, %v466
      %v492 = vpack.c.b16 %v469, %v468
      %v493 = vpack.c.b16 %v471, %v470
      %v494 = vpack.c.b16 %v473, %v472
      %v495 = vpack.c.b16 %v475, %v474
      %v496 = vpack.c.b16 %v477, %v476
      %v497 = vpack.c.b16 %v479, %v478
      %vm516 = vcmask 261120
      %v518 = vsel %vm516, %v400, 0
      %v521 = vsel %vm516, %v403, 0
      %523 = vmatprep.subr.bf16.mxu0 0
      %524 = vmatpush1.bf16.msra.mxu0 %v487
      %525 = vmatprep.subr.bf16.mxu0 0
      %526 = vmatpush1.bf16.msra.mxu0 %v486
      %527 = vmatprep.subr.bf16.mxu0 0
      %528 = vmatpush1.bf16.msra.mxu0 %v485
      %529 = vmatprep.subr.bf16.mxu0 0
      %530 = vmatpush1.bf16.msra.mxu0 %v484
      %531 = vmatprep.subr.bf16.mxu0 0
      %532 = vmatpush1.bf16.msra.mxu0 %v483
      %533 = vmatprep.subr.bf16.mxu0 0
      %534 = vmatpush1.bf16.msra.mxu0 %v482
      %535 = vmatprep.subr.bf16.mxu0 0
      %536 = vmatpush1.bf16.msra.mxu0 %v481
      %537 = vmatprep.subr.bf16.mxu0 0
      %538 = vmatpush1.bf16.msra.mxu0 %v480
      %539 = vmatprep.subr.bf16.mxu0 0
      %540 = vmatpush2.bf16.msra.mxu0 %v495
      %541 = vmatprep.subr.bf16.mxu0 0
      %542 = vmatpush2.bf16.msra.mxu0 %v494
      %543 = vmatprep.subr.bf16.mxu0 0
      %544 = vmatpush2.bf16.msra.mxu0 %v493
      %545 = vmatprep.subr.bf16.mxu0 0
      %546 = vmatpush2.bf16.msra.mxu0 %v492
      %547 = vmatprep.subr.bf16.mxu0 0
      %548 = vmatpush2.bf16.msra.mxu0 %v491
      %549 = vmatprep.subr.bf16.mxu0 0
      %550 = vmatpush2.bf16.msra.mxu0 %v490
      %551 = vmatprep.subr.bf16.mxu0 0
      %552 = vmatpush2.bf16.msra.mxu0 %v489
      %553 = vmatprep.subr.bf16.mxu0 0
      %554 = vmatpush2.bf16.msra.mxu0 %v488
      %555 = vmatprep.mubr.bf16.mxu0 %v399
      %556 = vmatmul.mubr.bf16.gmra.mxu0 %v398
      %v557 = vpop.f32.mrf.mxu0
      %v558 = vadd.f32 %v361, %v557
      %v559 = vpop.f32.mrf.mxu0
      %v560 = vpop.f32.mrf.mxu0
      %v561 = vadd.f32 %v366, %v560
      %v562 = vpop.f32.mrf.mxu0
      %563 = vmatprep.mubr.bf16.mxu0 %v402
      %564 = vmatmul.mubr.bf16.gmra.mxu0 %v401
      %v565 = vpop.f32.mrf.mxu0
      %v566 = vadd.f32 %v371, %v565
      %v567 = vpop.f32.mrf.mxu0
      %v568 = vpop.f32.mrf.mxu0
      %v569 = vadd.f32 %v376, %v568
      %v570 = vpop.f32.mrf.mxu0
      %571 = vdwg.mxu0
      %572 = vmatprep.subr.bf16.mxu0 0
      %573 = vmatpush1.bf16.msra.mxu0 0
      %574 = vmatprep.subr.bf16.mxu0 0
      %575 = vmatpush1.bf16.msra.mxu0 0
      %576 = vmatprep.subr.bf16.mxu0 0
      %577 = vmatpush1.bf16.msra.mxu0 0
      %578 = vmatprep.subr.bf16.mxu0 0
      %579 = vmatpush1.bf16.msra.mxu0 0
      %580 = vmatprep.subr.bf16.mxu0 0
      %581 = vmatpush1.bf16.msra.mxu0 0
      %582 = vmatprep.subr.bf16.mxu0 0
      %583 = vmatpush1.bf16.msra.mxu0 0
      %584 = vmatprep.subr.bf16.mxu0 0
      %585 = vmatpush1.bf16.msra.mxu0 %v497
      %586 = vmatprep.subr.bf16.mxu0 0
      %587 = vmatpush1.bf16.msra.mxu0 %v496
      %588 = vmatprep.subr.bf16.mxu0 0
      %589 = vmatpush2.bf16.msra.mxu0 0
      %590 = vmatprep.subr.bf16.mxu0 0
      %591 = vmatpush2.bf16.msra.mxu0 0
      %592 = vmatprep.subr.bf16.mxu0 0
      %593 = vmatpush2.bf16.msra.mxu0 0
      %594 = vmatprep.subr.bf16.mxu0 0
      %595 = vmatpush2.bf16.msra.mxu0 0
      %596 = vmatprep.subr.bf16.mxu0 0
      %597 = vmatpush2.bf16.msra.mxu0 0
      %598 = vmatprep.subr.bf16.mxu0 0
      %599 = vmatpush2.bf16.msra.mxu0 0
      %600 = vmatprep.subr.bf16.mxu0 0
      %601 = vmatpush2.bf16.msra.mxu0 0
      %602 = vmatprep.subr.bf16.mxu0 0
      %603 = vmatpush2.bf16.msra.mxu0 0
      %604 = vmatprep.mubr.bf16.mxu0 0
      %605 = vmatmul.mubr.bf16.gmra.mxu0 %v518
      %v606 = vpop.f32.mrf.mxu0
      %v607 = vadd.f32 %v558, %v606
      %v608 = vpop.f32.mrf.mxu0
      %v609 = vpop.f32.mrf.mxu0
      %v610 = vadd.f32 %v561, %v609
      %v611 = vpop.f32.mrf.mxu0
      %612 = vmatprep.mubr.bf16.mxu0 0
      %613 = vmatmul.mubr.bf16.gmra.mxu0 %v521
      %v614 = vpop.f32.mrf.mxu0
      %v615 = vadd.f32 %v566, %v614
      %v616 = vpop.f32.mrf.mxu0
      %v617 = vpop.f32.mrf.mxu0
      %v618 = vadd.f32 %v569, %v617
      %v619 = vpop.f32.mrf.mxu0
      %620 = vdwg.mxu0
      %vm621 = vcmp.gt.f32.partialorder %v607, 0.0
      %vm622 = vcmp.gt.f32.partialorder %v610, 0.0
      %vm623 = vcmp.gt.f32.partialorder %v615, 0.0
      %vm624 = vcmp.gt.f32.partialorder %v618, 0.0
      %v625 = vmul.f32 %v607, 0.01
      %v626 = vmul.f32 %v610, 0.01
      %v627 = vmul.f32 %v615, 0.01
      %v628 = vmul.f32 %v618, 0.01
      %v629 = vsel %vm621, %v607, %v625
      %v630 = vsel %vm622, %v610, %v626
      %v631 = vsel %vm623, %v615, %v627
      %v632 = vsel %vm624, %v618, %v628
      %v633 = vlaneseq
      %v634 = vand.u32 %v633, 127
      %s635 = smul.u32 %s23, 128
      %v636 = vstv %s635
      %v637 = vadd.s32 %v634, %v636
      %vm638 = vcmp.lt.s32.totalorder %v637, 16
      %v639 = vsel %vm638, %v629, 0.0
      %v640 = vsel %vm638, %v630, 0.0
      %v641 = vsel %vm638, %v631, 0.0
      %v642 = vsel %vm638, %v632, 0.0
      %v643 = vld [vmem:[#allocation2] sm:$0xff]
      %v644 = vld [vmem:[#allocation2 + $0x8] sm:$0xff]
      %v645 = vld [vmem:[#allocation2 + $0x10] sm:$0xff]
      %v646 = vld [vmem:[#allocation2 + $0x18] sm:$0xff]
      %647 = vadd.xlane.f32.xlu0 %v639
      %v648 = vpop.xlane.xlu0 %647
      %649 = vadd.xlane.f32.xlu0 %v640
      %v650 = vpop.xlane.xlu0 %649
      %651 = vadd.xlane.f32.xlu0 %v641
      %v652 = vpop.xlane.xlu0 %651
      %653 = vadd.xlane.f32.xlu0 %v642
      %v654 = vpop.xlane.xlu0 %653
      %v655 = vadd.f32 %v643, %v648
      %v656 = vadd.f32 %v644, %v650
      %v657 = vadd.f32 %v645, %v652
      %v658 = vadd.f32 %v646, %v654
      %vm659 = vcmask 7168
      %660 = vst.msk [vmem:[#allocation2] sm:$0xff] %vm659, %v655
      %661 = vst.msk [vmem:[#allocation2 + $0x8] sm:$0xff] %vm659, %v656
      %662 = vst.msk [vmem:[#allocation2 + $0x10] sm:$0xff] %vm659, %v657
      %663 = vst.msk [vmem:[#allocation2 + $0x18] sm:$0xff] %vm659, %v658
      // Predicated region
      $region53: #{_lambda_.7} parent=47 // pred_check
        %p664 = pneg %p301
      $region54: #{_lambda_.7} parent=47 // pred_check_branch
        %666 = sbr.rel (%p664) target = $region56
      $region55: #{_lambda_.7} parent=47 // pred_region
        %v667 = vld [vmem:[#allocation2] sm:$0xff]
        %v668 = vld [vmem:[#allocation2 + $0x8] sm:$0xff]
        %v669 = vld [vmem:[#allocation2 + $0x10] sm:$0xff]
        %v670 = vld [vmem:[#allocation2 + $0x18] sm:$0xff]
        %v671 = vmul.f32 %v667, 0.0625
        %v672 = vmul.f32 %v668, 0.0625
        %v673 = vmul.f32 %v669, 0.0625
        %v674 = vmul.f32 %v670, 0.0625
        %676 = vset.pattern.permute.xlu0 0
        %677 = vperm.xlu0 %676, %v671
        %v678 = vpop.permute.xlu0 %677
        %681 = vset.pattern.permute.xlu0 0
        %682 = vperm.xlu0 %681, %v672
        %v683 = vpop.permute.xlu0 %682
        %686 = vset.pattern.permute.xlu0 0
        %687 = vperm.xlu0 %686, %v673
        %v688 = vpop.permute.xlu0 %687
        %691 = vset.pattern.permute.xlu0 0
        %692 = vperm.xlu0 %691, %v674
        %v693 = vpop.permute.xlu0 %692
        %v695 = vld [vmem:[%s3] sm:$0xff]
        %v696 = vld [vmem:[%s3 + $0x8] sm:$0xff]
        %v697 = vld [vmem:[%s3 + $0x10] sm:$0xff]
        %v698 = vld [vmem:[%s3 + $0x18] sm:$0xff]
        %v699 = vld [vmem:[%s4] sm:$0xff]
        %v700 = vld [vmem:[%s4 + $0x8] sm:$0xff]
        %v701 = vld [vmem:[%s4 + $0x10] sm:$0xff]
        %v702 = vld [vmem:[%s4 + $0x18] sm:$0xff]
        %704 = vset.pattern.permute.xlu0 0
        %705 = vperm.xlu0 %704, %v699
        %v706 = vpop.permute.xlu0 %705
        %709 = vset.pattern.permute.xlu0 0
        %710 = vperm.xlu0 %709, %v700
        %v711 = vpop.permute.xlu0 %710
        %714 = vset.pattern.permute.xlu0 0
        %715 = vperm.xlu0 %714, %v701
        %v716 = vpop.permute.xlu0 %715
        %719 = vset.pattern.permute.xlu0 0
        %720 = vperm.xlu0 %719, %v702
        %v721 = vpop.permute.xlu0 %720
        %v724 = vsel %vm516, %v695, 0
        %v727 = vsel %vm516, %v696, 0
        %v730 = vsel %vm516, %v697, 0
        %v733 = vsel %vm516, %v698, 0
        %735 = vmatprep.subr.mxu0 0.0
        %736 = vmatpush1.msra.mxu0 0.0
        %737 = vmatprep.subr.mxu0 0.0
        %738 = vmatpush1.msra.mxu0 0.0
        %739 = vmatprep.subr.mxu0 0.0
        %740 = vmatpush1.msra.mxu0 0.0
        %741 = vmatprep.subr.mxu0 0.0
        %742 = vmatpush1.msra.mxu0 0.0
        %743 = vmatprep.subr.mxu0 0.0
        %744 = vmatpush1.msra.mxu0 0.0
        %745 = vmatprep.subr.mxu0 0.0
        %746 = vmatpush1.msra.mxu0 0.0
        %747 = vmatprep.subr.mxu0 0.0
        %748 = vmatpush1.msra.mxu0 0.0
        %749 = vmatprep.subr.mxu0 0.0
        %750 = vmatpush1.msra.mxu0 0.0
        %751 = vmatprep.subr.mxu0 0.0
        %752 = vmatpush1.msra.mxu0 0.0
        %753 = vmatprep.subr.mxu0 0.0
        %754 = vmatpush1.msra.mxu0 0.0
        %755 = vmatprep.subr.mxu0 0.0
        %756 = vmatpush1.msra.mxu0 0.0
        %757 = vmatprep.subr.mxu0 0.0
        %758 = vmatpush1.msra.mxu0 0.0
        %759 = vmatprep.subr.mxu0 0.0
        %760 = vmatpush1.msra.mxu0 %v693
        %761 = vmatprep.subr.mxu0 0.0
        %762 = vmatpush1.msra.mxu0 %v688
        %763 = vmatprep.subr.mxu0 0.0
        %764 = vmatpush1.msra.mxu0 %v683
        %765 = vmatprep.subr.mxu0 0.0
        %766 = vmatpush1.msra.mxu0 %v678
        %767 = vmatprep.subr.mxu0 0.0
        %768 = vmatpush2.msra.mxu0 0.0
        %769 = vmatprep.subr.mxu0 0.0
        %770 = vmatpush2.msra.mxu0 0.0
        %771 = vmatprep.subr.mxu0 0.0
        %772 = vmatpush2.msra.mxu0 0.0
        %773 = vmatprep.subr.mxu0 0.0
        %774 = vmatpush2.msra.mxu0 0.0
        %775 = vmatprep.subr.mxu0 0.0
        %776 = vmatpush2.msra.mxu0 0.0
        %777 = vmatprep.subr.mxu0 0.0
        %778 = vmatpush2.msra.mxu0 0.0
        %779 = vmatprep.subr.mxu0 0.0
        %780 = vmatpush2.msra.mxu0 0.0
        %781 = vmatprep.subr.mxu0 0.0
        %782 = vmatpush2.msra.mxu0 0.0
        %783 = vmatprep.subr.mxu0 0.0
        %784 = vmatpush2.msra.mxu0 0.0
        %785 = vmatprep.subr.mxu0 0.0
        %786 = vmatpush2.msra.mxu0 0.0
        %787 = vmatprep.subr.mxu0 0.0
        %788 = vmatpush2.msra.mxu0 0.0
        %789 = vmatprep.subr.mxu0 0.0
        %790 = vmatpush2.msra.mxu0 0.0
        %791 = vmatprep.subr.mxu0 0.0
        %792 = vmatpush2.msra.mxu0 0.0
        %793 = vmatprep.subr.mxu0 0.0
        %794 = vmatpush2.msra.mxu0 0.0
        %795 = vmatprep.subr.mxu0 0.0
        %796 = vmatpush2.msra.mxu0 0.0
        %797 = vmatprep.subr.mxu0 0.0
        %798 = vmatpush2.msra.mxu0 0.0
        %799 = vmatprep.mubr.f32.mxu0 0.0
        %800 = vmatmul.mubr.f32.gmra.mxu0 %v724
        %v801 = vpop.f32.mrf.mxu0
        %v802 = vadd.f32 %v706, %v801
        %v803 = vpop.f32.mrf.mxu0
        %804 = vmatprep.mubr.f32.mxu0 0.0
        %805 = vmatmul.mubr.f32.gmra.mxu0 %v727
        %v806 = vpop.f32.mrf.mxu0
        %v807 = vadd.f32 %v711, %v806
        %v808 = vpop.f32.mrf.mxu0
        %809 = vmatprep.mubr.f32.mxu0 0.0
        %810 = vmatmul.mubr.f32.gmra.mxu0 %v730
        %v811 = vpop.f32.mrf.mxu0
        %v812 = vadd.f32 %v716, %v811
        %v813 = vpop.f32.mrf.mxu0
        %814 = vmatprep.mubr.f32.mxu0 0.0
        %815 = vmatmul.mubr.f32.gmra.mxu0 %v733
        %v816 = vpop.f32.mrf.mxu0
        %v817 = vadd.f32 %v721, %v816
        %v818 = vpop.f32.mrf.mxu0
        %819 = vdwg.mxu0
        %vm820 = vcmp.gt.f32.partialorder %v802, 0.0
        %vm821 = vcmp.gt.f32.partialorder %v807, 0.0
        %vm822 = vcmp.gt.f32.partialorder %v812, 0.0
        %vm823 = vcmp.gt.f32.partialorder %v817, 0.0
        %v824 = vmul.f32 %v802, 0.01
        %v825 = vmul.f32 %v807, 0.01
        %v826 = vmul.f32 %v812, 0.01
        %v827 = vmul.f32 %v817, 0.01
        %v828 = vsel %vm820, %v802, %v824
        %v829 = vsel %vm821, %v807, %v825
        %v830 = vsel %vm822, %v812, %v826
        %v831 = vsel %vm823, %v817, %v827
        %v832 = vld [vmem:[%s5] sm:$0x7f]
        %v833 = vld [vmem:[%s6] sm:$0x7f]
        %835 = vset.pattern.permute.xlu0 0
        %836 = vperm.xlu0 %835, %v833
        %v837 = vpop.permute.xlu0 %836
        %v840 = vsel %vm516, %v832, 0
        %842 = vmatprep.subr.mxu0 0.0
        %843 = vmatpush1.msra.mxu0 0.0
        %844 = vmatprep.subr.mxu0 0.0
        %845 = vmatpush1.msra.mxu0 0.0
        %846 = vmatprep.subr.mxu0 0.0
        %847 = vmatpush1.msra.mxu0 0.0
        %848 = vmatprep.subr.mxu0 0.0
        %849 = vmatpush1.msra.mxu0 0.0
        %850 = vmatprep.subr.mxu0 0.0
        %851 = vmatpush1.msra.mxu0 0.0
        %852 = vmatprep.subr.mxu0 0.0
        %853 = vmatpush1.msra.mxu0 0.0
        %854 = vmatprep.subr.mxu0 0.0
        %855 = vmatpush1.msra.mxu0 0.0
        %856 = vmatprep.subr.mxu0 0.0
        %857 = vmatpush1.msra.mxu0 0.0
        %858 = vmatprep.subr.mxu0 0.0
        %859 = vmatpush1.msra.mxu0 0.0
        %860 = vmatprep.subr.mxu0 0.0
        %861 = vmatpush1.msra.mxu0 0.0
        %862 = vmatprep.subr.mxu0 0.0
        %863 = vmatpush1.msra.mxu0 0.0
        %864 = vmatprep.subr.mxu0 0.0
        %865 = vmatpush1.msra.mxu0 0.0
        %866 = vmatprep.subr.mxu0 0.0
        %867 = vmatpush1.msra.mxu0 %v831
        %868 = vmatprep.subr.mxu0 0.0
        %869 = vmatpush1.msra.mxu0 %v830
        %870 = vmatprep.subr.mxu0 0.0
        %871 = vmatpush1.msra.mxu0 %v829
        %872 = vmatprep.subr.mxu0 0.0
        %873 = vmatpush1.msra.mxu0 %v828
        %874 = vmatprep.subr.mxu0 0.0
        %875 = vmatpush2.msra.mxu0 0.0
        %876 = vmatprep.subr.mxu0 0.0
        %877 = vmatpush2.msra.mxu0 0.0
        %878 = vmatprep.subr.mxu0 0.0
        %879 = vmatpush2.msra.mxu0 0.0
        %880 = vmatprep.subr.mxu0 0.0
        %881 = vmatpush2.msra.mxu0 0.0
        %882 = vmatprep.subr.mxu0 0.0
        %883 = vmatpush2.msra.mxu0 0.0
        %884 = vmatprep.subr.mxu0 0.0
        %885 = vmatpush2.msra.mxu0 0.0
        %886 = vmatprep.subr.mxu0 0.0
        %887 = vmatpush2.msra.mxu0 0.0
        %888 = vmatprep.subr.mxu0 0.0
        %889 = vmatpush2.msra.mxu0 0.0
        %890 = vmatprep.subr.mxu0 0.0
        %891 = vmatpush2.msra.mxu0 0.0
        %892 = vmatprep.subr.mxu0 0.0
        %893 = vmatpush2.msra.mxu0 0.0
        %894 = vmatprep.subr.mxu0 0.0
        %895 = vmatpush2.msra.mxu0 0.0
        %896 = vmatprep.subr.mxu0 0.0
        %897 = vmatpush2.msra.mxu0 0.0
        %898 = vmatprep.subr.mxu0 0.0
        %899 = vmatpush2.msra.mxu0 0.0
        %900 = vmatprep.subr.mxu0 0.0
        %901 = vmatpush2.msra.mxu0 0.0
        %902 = vmatprep.subr.mxu0 0.0
        %903 = vmatpush2.msra.mxu0 0.0
        %904 = vmatprep.subr.mxu0 0.0
        %905 = vmatpush2.msra.mxu0 0.0
        %906 = vmatprep.mubr.f32.mxu0 0.0
        %907 = vmatmul.mubr.f32.gmra.mxu0 %v840
        %v908 = vpop.f32.mrf.mxu0
        %v909 = vadd.f32 %v837, %v908
        %v910 = vpop.f32.mrf.mxu0
        %911 = vdwg.mxu0
        %vm912 = vcmask 6144
        %913 = vst.msk [vmem:[%s299] sm:$0x7f] %vm912, %v909
      $region56: #{_lambda_.7} parent=47 // pred_fallthru
        _
      %p914 = scmp.lt.s32.totalorder %s22, 1
      %s915 = scalar_select %p914, %s22, 1
      %s916 = smul.addr %s915, 8
      %s917 = scalar_lea.vmem %s7, %s916
      // Predicated region
      $region57: #{_lambda_.7} parent=47 // pred_check
        %p918 = pneg %p202
      $region58: #{_lambda_.7} parent=47 // pred_check_branch
        %920 = sbr.rel (%p918) target = $region60
      $region59: #{_lambda_.7} parent=47 // pred_region
        _
      $region60: #{_lambda_.7} parent=47 // pred_fallthru
        _
    $region48: #{_lambda_.7} parent=5 // pred_fallthru
      _
    %p921 = scmp.le.s32.totalorder 2, %s13
    // Predicated region
    $region61: #{_lambda_.7} parent=5 // pred_check
      %p922 = pneg %p921
    $region62: #{_lambda_.7} parent=5 // pred_check_branch
      %924 = sbr.rel (%p922) target = $region64
    $region63: #{_lambda_.7} parent=5 // pred_region
      %s925 = ssub.s32 %s13, 2
      // Predicated region
      $region65: #{_lambda_.7} parent=63 // pred_check
        %p926 = pneg %p208
      $region66: #{_lambda_.7} parent=63 // pred_check_branch
        %928 = sbr.rel (%p926) target = $region68
      $region67: #{_lambda_.7} parent=63 // pred_region
        %p929 = scmp.lt.s32.totalorder %s24, 1
        %s930 = scalar_select %p929, %s24, 1
        %s931 = smul.addr %s930, 8
        %s932 = scalar_lea.vmem %s7, %s931
      $region68: #{_lambda_.7} parent=63 // pred_fallthru
        _
    $region64: #{_lambda_.7} parent=5 // pred_fallthru
      _
  $region6: #{_lambda_.7} parent=0 // loop_footer
    %s17 = sadd.s32 1, %s13
  $region7: #{_lambda_.7} parent=0 // loop_footer_branch
    %12 = sbr.rel target = $region3
  $region8: #{_lambda_.7} parent=0 // loop_exit
    _

</llo_original>
